<compile_context>
chip_gen: v7x
topology: tpu7x:2x2x1
jax: 0.10.0
libtpu: 0.0.40
codegen_flags: <defaults>
</compile_context>

<pallas_src>
import functools

import jax
import jax.numpy as jnp
from jax.experimental import pallas as pl
from jax.experimental.pallas import tpu as pltpu

NUM_CLASSES = 3
PRIORS_PER_LOC = 2
CLS_OUT = PRIORS_PER_LOC * NUM_CLASSES   # 6
REG_OUT = PRIORS_PER_LOC * 4             # 8
HEAD_OUT = CLS_OUT + REG_OUT             # 14


# ------------- conv -> single-matmul expansion (taps fused along K) --------- #

def _expand_group(blocks, hin, win, stride):
    """Expand convs that share one input activation & stride into one matmul.

    blocks: list of (w_hwio, bias) convs applied to the same (hin, win, cin)
    input.  Returns (wk, b_row, ho, wo) with
        wk    : (3*win*cin, sum_i wo*cout_i)
        b_row : (sum_i wo*cout_i,)
    such that  out = rows_cat @ wk + b_row, where
        rows_cat[i, kh*win*cin + jin*cin + ci] = x[stride*i + kh - 1, jin, ci]
    (zero outside the image).  Zero column-padding / stride on W is folded
    into wk; the kh taps are fused along the contraction axis.
    """
    ho = (hin - 1) // stride + 1
    wo = (win - 1) // stride + 1
    jin = jnp.arange(win)[:, None]
    jout = jnp.arange(wo)[None, :]
    kw = jin - stride * jout + 1                      # (win, wo)
    valid = ((kw >= 0) & (kw <= 2)).astype(jnp.float32)
    kw_c = jnp.clip(kw, 0, 2)
    wks, brs = [], []
    for w, b in blocks:
        cin, cout = w.shape[2], w.shape[3]
        wg = w[:, kw_c, :, :] * valid[None, :, :, None, None]  # (3,win,wo,cin,cout)
        wk = jnp.transpose(wg, (0, 1, 3, 2, 4)).reshape(3 * win * cin, wo * cout)
        wks.append(wk)
        brs.append(jnp.tile(b, (wo,)))
    return jnp.concatenate(wks, axis=1), jnp.concatenate(brs, axis=0), ho, wo


def _padded_header(params, i, cpad):
    """Fuse cls(6)+reg(8) header convs along Cout and zero-pad to cpad."""
    wc_, bc_ = params["classification_headers"][i]
    wr_, br_ = params["regression_headers"][i]
    w = jnp.concatenate([wc_, wr_], axis=3)
    b = jnp.concatenate([bc_, br_], axis=0)
    pad = cpad - w.shape[3]
    if pad:
        w = jnp.concatenate(
            [w, jnp.zeros(w.shape[:3] + (pad,), w.dtype)], axis=3)
        b = jnp.concatenate([b, jnp.zeros((pad,), b.dtype)], axis=0)
    return w, b


# ------------------------------ fused kernel -------------------------------- #

def _ssd_kernel(*refs, stages, n_w, n_s, n_out, imgs):
    """Full SSD forward for a block of `imgs` images, entirely in VMEM.

    refs = (x, wk*n_w, s*n_s, b_all, header_out*n_out, scratch).
    `stages` is a static tuple; each stage is one fused matmul
    (trunk conv and/or header conv(s) sharing the same input activation).
    """
    x_ref = refs[0]
    wk_refs = refs[1:1 + n_w]
    s_refs = refs[1 + n_w:1 + n_w + n_s]
    b_ref = refs[1 + n_w + n_s]
    out_refs = refs[2 + n_w + n_s:2 + n_w + n_s + n_out]
    scr = refs[2 + n_w + n_s + n_out]

    # Zero the top halo row once; it is never written afterwards.
    scr[0:1, :] = jnp.zeros((1, scr.shape[1]), jnp.float32)

    for img in range(imgs):
        x = x_ref[img]                               # (H0, W0*C0), f32
        for st in stages:
            hin, wc, ho = st["hin"], st["wc"], st["ho"]
            if st["stride"] == 1:
                # Halo'd trunk copy in scratch; the 3 kh taps become plain
                # shifted row-window loads (no row-select matmuls on the MXU).
                scr[1:hin + 1, :wc] = x
                scr[hin + 1:hin + 2, :wc] = jnp.zeros((1, wc), jnp.float32)
                rows = jnp.concatenate(
                    [scr[kh:kh + ho, :wc] for kh in range(3)], axis=1)
            else:
                # Stride-2: tiny 0/1 row-selection matmuls (only 2 such convs).
                s = s_refs[st["s_idx"]]
                rows = jnp.concatenate(
                    [jnp.dot(s[kh], x, preferred_element_type=jnp.float32)
                     for kh in range(3)], axis=1)
            # One MXU matmul per stage: all 3 taps fused along K, trunk conv
            # and header conv(s) fused along N (lane-dense output columns).
            out = jnp.dot(rows, wk_refs[st["w_idx"]][...],
                          preferred_element_type=jnp.float32)
            out = out + b_ref[st["b_idx"]:st["b_idx"] + 1, :st["width"]]
            for oi, lo, lw in st["headers"]:          # headers: no ReLU
                out_refs[oi][img] = out[:, lo:lo + lw].astype(out_refs[oi].dtype)
            if st["trunk_lanes"]:                     # trunk conv: ReLU
                x = jnp.maximum(out[:, :st["trunk_lanes"]], 0.0)


# ------------------------- parameter construction --------------------------- #

def _init_conv(key, cin, cout):
    """Deterministic Xavier-uniform-like init for a 3x3 conv + bias (HWIO)."""
    kw_, kb_ = jax.random.split(key)
    fan_in, fan_out = cin * 9, cout * 9
    limit = (6.0 / (fan_in + fan_out)) ** 0.5
    w = jax.random.uniform(kw_, (3, 3, cin, cout), jnp.float32, -limit, limit)
    b = jax.random.uniform(kb_, (cout,), jnp.float32, -0.1, 0.1)
    return w, b


def make_ssd_params(key):
    keys = jax.random.split(key, 10)
    return {
        # base_net: list of (weight, bias, stride); every layer is conv+ReLU
        "base_net": [
            _init_conv(keys[0], 3, 8) + (1,),
            _init_conv(keys[1], 8, 16) + (2,),
            _init_conv(keys[2], 16, 16) + (1,),
        ],
        # simple-int source layer indexes (no GraphPath / tuple variants used)
        "source_layer_indexes": [2, 3],
        "extras": [
            _init_conv(keys[3], 16, 16) + (2,),
        ],
        "classification_headers": [
            _init_conv(keys[4], 16, CLS_OUT),
            _init_conv(keys[5], 16, CLS_OUT),
            _init_conv(keys[6], 16, CLS_OUT),
        ],
        "regression_headers": [
            _init_conv(keys[7], 16, REG_OUT),
            _init_conv(keys[8], 16, REG_OUT),
            _init_conv(keys[9], 16, REG_OUT),
        ],
    }


# -------------------------------- SSD forward -------------------------------- #

def ssd_forward(params, x_nchw):
    x = jnp.transpose(x_nchw, (0, 2, 3, 1)).astype(jnp.float32)   # NCHW -> NHWC
    n, h0, w0, c0 = x.shape

    # 1) Op sequence exactly as the PyTorch forward control flow.
    seq = []
    start = end = 0
    hdr_count = 0
    for end in params["source_layer_indexes"]:
        for layer in params["base_net"][start:end]:
            seq.append(("conv", layer))
        seq.append(("header", hdr_count)); hdr_count += 1
        start = end
    for layer in params["base_net"][end:]:
        seq.append(("conv", layer))
    for layer in params["extras"]:
        seq.append(("conv", layer))
        seq.append(("header", hdr_count)); hdr_count += 1

    # 2) Group ops that consume the same trunk activation with the same stride
    #    (a run of headers optionally fused with the following stride-1 conv).
    groups, cur = [], []
    for item in seq:
        kind, payload = item
        if kind == "conv" and cur and payload[2] != 1:
            groups.append(cur); cur = []
        cur.append(item)
        if kind == "conv":
            groups.append(cur); cur = []
    if cur:
        groups.append(cur)

    # 3) Expand each group into one fused (rows @ Wk + b) stage.
    wk_list, s_list, b_rows, stages = [], [], [], []
    hdr_meta = [None] * hdr_count                 # (ho, wo, cpad) per header
    cur_h, cur_w, cur_c = h0, w0, c0
    for g in groups:
        convs = [p for k, p in g if k == "conv"]
        hdrs = [p for k, p in g if k == "header"]
        stride = convs[0][2] if convs else 1
        wo = (cur_w - 1) // stride + 1
        blocks = []
        if convs:
            blocks.append((convs[0][0], convs[0][1]))
        trunk_lanes = wo * convs[0][0].shape[3] if convs else 0
        lane = trunk_lanes
        hdr_slices = []
        for hi in hdrs:
            cpad = 16 if (wo * 16) % 128 == 0 else 32   # lane-dense header block
            blocks.append(_padded_header(params, hi, cpad))
            hdr_slices.append((hi, lane, wo * cpad))
            lane += wo * cpad
        wk, b_row, ho, wo = _expand_group(blocks, cur_h, cur_w, stride)
        if stride != 1:
            i_ = jnp.arange(ho)[:, None]
            r_ = jnp.arange(cur_h)[None, :]
            s_m = jnp.stack([(r_ == stride * i_ + kh - 1) for kh in range(3)],
                            axis=0).astype(jnp.float32)
            s_idx = len(s_list); s_list.append(s_m)
        else:
            s_idx = -1
        for hi, lo, lw in hdr_slices:
            hdr_meta[hi] = (ho, wo, lw // wo)
        stages.append(dict(
            stride=stride, hin=cur_h, wc=cur_w * cur_c, ho=ho,
            w_idx=len(wk_list), s_idx=s_idx, b_idx=len(b_rows),
            width=int(wk.shape[1]), trunk_lanes=trunk_lanes,
            headers=tuple(hdr_slices)))
        wk_list.append(wk); b_rows.append(b_row)
        if convs:
            cur_h, cur_w, cur_c = ho, wo, convs[0][0].shape[3]

    max_width = max(int(b.shape[0]) for b in b_rows)
    b_all = jnp.stack(
        [jnp.pad(b, (0, max_width - int(b.shape[0]))) for b in b_rows], axis=0)

    scr_rows = -(-(max(st["hin"] for st in stages) + 2) // 8) * 8
    scr_cols = -(-max(st["wc"] for st in stages) // 128) * 128

    # 4) pallas_call: grid over image blocks (2-way "parallel" for megacore on
    #    v7x; a cheap 2-step loop on single-TC v5e/v6e).
    nb = 2 if (n % 2 == 0 and n >= 2) else 1
    ips = n // nb
    x2d = x.reshape(n, h0, w0 * c0)

    in_specs = [pl.BlockSpec((ips, h0, w0 * c0), lambda b: (b, 0, 0))]
    for wk in wk_list:
        in_specs.append(pl.BlockSpec(wk.shape, lambda b: (0, 0)))
    for s_m in s_list:
        in_specs.append(pl.BlockSpec(s_m.shape, lambda b: (0, 0, 0)))
    in_specs.append(pl.BlockSpec(b_all.shape, lambda b: (0, 0)))

    out_shape = tuple(
        jax.ShapeDtypeStruct((n, ho, wo * cpad), jnp.float32)
        for (ho, wo, cpad) in hdr_meta)
    out_specs = tuple(
        pl.BlockSpec((ips,) + s.shape[1:], lambda b: (b, 0, 0))
        for s in out_shape)

    outs = pl.pallas_call(
        functools.partial(_ssd_kernel, stages=tuple(stages), n_w=len(wk_list),
                          n_s=len(s_list), n_out=hdr_count, imgs=ips),
        out_shape=out_shape,
        grid=(nb,),
        in_specs=in_specs,
        out_specs=out_specs,
        scratch_shapes=[pltpu.VMEM((scr_rows, scr_cols), jnp.float32)],
        compiler_params=pltpu.CompilerParams(
            dimension_semantics=("parallel",)),
    )(x2d, *wk_list, *s_list, b_all)

    confidences, locations = [], []
    for o, (ho, wo, cpad) in zip(outs, hdr_meta):
        o4 = o.reshape(n, ho, wo, cpad)                 # NHWC header output
        confidences.append(o4[..., :CLS_OUT].reshape(n, -1, NUM_CLASSES))
        locations.append(o4[..., CLS_OUT:CLS_OUT + REG_OUT].reshape(n, -1, 4))
    confidences = jnp.concatenate(confidences, axis=1)
    locations = jnp.concatenate(locations, axis=1)
    # TODO(synk): is_test branch (softmax + prior-box decoding) not implemented;
    # module default is is_test=False which returns (confidences, locations).
    return confidences, locations


# ----------------------- pure-JAX reference (checking) ---------------------- #

def _conv_ref(x, w, b, stride):
    out = jax.lax.conv_general_dilated(
        x, w, window_strides=(stride, stride), padding=((1, 1), (1, 1)),
        dimension_numbers=("NHWC", "HWIO", "NHWC"))
    return out + b


def ssd_forward_ref(params, x_nchw):
    x = jnp.transpose(x_nchw, (0, 2, 3, 1))
    n = x.shape[0]
    confidences, locations = [], []

    def header(i, y):
        wc, bc = params["classification_headers"][i]
        wr, br = params["regression_headers"][i]
        conf = _conv_ref(y, wc, bc, 1).reshape(n, -1, NUM_CLASSES)
        loc = _conv_ref(y, wr, br, 1).reshape(n, -1, 4)
        return conf, loc

    start = 0
    end = 0
    hdr = 0
    for end in params["source_layer_indexes"]:
        for (w, b, s) in params["base_net"][start:end]:
            x = jax.nn.relu(_conv_ref(x, w, b, s))
        c, l = header(hdr, x); hdr += 1
        confidences.append(c); locations.append(l)
        start = end
    for (w, b, s) in params["base_net"][end:]:
        x = jax.nn.relu(_conv_ref(x, w, b, s))
    for (w, b, s) in params["extras"]:
        x = jax.nn.relu(_conv_ref(x, w, b, s))
        c, l = header(hdr, x); hdr += 1
        confidences.append(c); locations.append(l)
    return jnp.concatenate(confidences, 1), jnp.concatenate(locations, 1)


# ------------------------------------ main ----------------------------------- #

if __name__ == "__main__":
    key = jax.random.PRNGKey(0)
    kp, kx = jax.random.split(key)
    params = make_ssd_params(kp)
    x = jax.random.normal(kx, (2, 3, 16, 16), jnp.float32)   # NCHW input
    conf, loc = ssd_forward(params, x)
    jax.block_until_ready((conf, loc))
    # 16x16 -> 8x8 -> 8x8 -> 4x4; headers see 8x8, 8x8, 4x4 with 2 priors each:
    # (64 + 64 + 16) * 2 = 288 priors
    assert conf.shape == (2, 288, NUM_CLASSES), conf.shape
    assert loc.shape == (2, 288, 4), loc.shape
    # Correctness vs. plain-JAX conv reference.
    conf_r, loc_r = ssd_forward_ref(params, x)
    assert float(jnp.max(jnp.abs(conf - conf_r))) < 1e-3
    assert float(jnp.max(jnp.abs(loc - loc_r))) < 1e-3
    print("KERNEL_OK")
</pallas_src>

<mosaic_0001>
module attributes {stable_mosaic.version = 11 : i64} {
  func.func @_ssd_kernel(%arg0: i32, %arg1: memref<1x16x48xf32, #tpu.memory_space<vmem>>, %arg2: memref<144x128xf32, #tpu.memory_space<vmem>>, %arg3: memref<384x128xf32, #tpu.memory_space<vmem>>, %arg4: memref<384x256xf32, #tpu.memory_space<vmem>>, %arg5: memref<384x128xf32, #tpu.memory_space<vmem>>, %arg6: memref<384x64xf32, #tpu.memory_space<vmem>>, %arg7: memref<192x128xf32, #tpu.memory_space<vmem>>, %arg8: memref<3x8x16xf32, #tpu.memory_space<vmem>>, %arg9: memref<3x4x8xf32, #tpu.memory_space<vmem>>, %arg10: memref<6x256xf32, #tpu.memory_space<vmem>>, %arg11: memref<1x8x128xf32, #tpu.memory_space<vmem>>, %arg12: memref<1x8x128xf32, #tpu.memory_space<vmem>>, %arg13: memref<1x4x128xf32, #tpu.memory_space<vmem>>, %arg14: memref<24x128xf32, #tpu.memory_space<vmem>>) attributes {dimension_semantics = [#tpu.dimension_semantics<parallel>], iteration_bounds = array<i64: 2>, scalar_prefetch = 0 : i64, scratch_operands = 1 : i64, tpu.core_type = #tpu.core_type<tc>, window_params = [{transform_indices = @transform_0, window_bounds = array<i64: 1, 16, 48>}, {pipeline_mode = #tpu.pipeline_mode<synchronous>, transform_indices = @transform_1, window_bounds = array<i64: 144, 128>}, {pipeline_mode = #tpu.pipeline_mode<synchronous>, transform_indices = @transform_2, window_bounds = array<i64: 384, 128>}, {pipeline_mode = #tpu.pipeline_mode<synchronous>, transform_indices = @transform_3, window_bounds = array<i64: 384, 256>}, {pipeline_mode = #tpu.pipeline_mode<synchronous>, transform_indices = @transform_4, window_bounds = array<i64: 384, 128>}, {pipeline_mode = #tpu.pipeline_mode<synchronous>, transform_indices = @transform_5, window_bounds = array<i64: 384, 64>}, {pipeline_mode = #tpu.pipeline_mode<synchronous>, transform_indices = @transform_6, window_bounds = array<i64: 192, 128>}, {pipeline_mode = #tpu.pipeline_mode<synchronous>, transform_indices = @transform_7, window_bounds = array<i64: 3, 8, 16>}, {pipeline_mode = #tpu.pipeline_mode<synchronous>, transform_indices = @transform_8, window_bounds = array<i64: 3, 4, 8>}, {pipeline_mode = #tpu.pipeline_mode<synchronous>, transform_indices = @transform_9, window_bounds = array<i64: 6, 256>}, {transform_indices = @transform_10, window_bounds = array<i64: 1, 8, 128>}, {transform_indices = @transform_11, window_bounds = array<i64: 1, 8, 128>}, {transform_indices = @transform_12, window_bounds = array<i64: 1, 4, 128>}]} {
    %cst = arith.constant 0.000000e+00 : f32
    %0 = vector.broadcast %cst : f32 to vector<1x128xf32>
    %c0 = arith.constant 0 : index
    %c0_0 = arith.constant 0 : index
    %1 = vector.load %arg14[%c0, %c0_0] : memref<24x128xf32, #tpu.memory_space<vmem>>, vector<1x128xf32>
    tpu.vector_store %arg14[%c0, %c0_0], %0 {strides = array<i32>} : memref<24x128xf32, #tpu.memory_space<vmem>>, vector<1x128xf32>,
    %c0_1 = arith.constant 0 : index
    %c0_2 = arith.constant 0 : index
    %c0_3 = arith.constant 0 : index
    %2 = vector.load %arg1[%c0_1, %c0_2, %c0_3] : memref<1x16x48xf32, #tpu.memory_space<vmem>>, vector<1x16x48xf32>
    %3 = vector.shape_cast %2 : vector<1x16x48xf32> to vector<16x48xf32>
    %c1 = arith.constant 1 : index
    %c0_4 = arith.constant 0 : index
    %4 = vector.load %arg14[%c1, %c0_4] : memref<24x128xf32, #tpu.memory_space<vmem>>, vector<16x48xf32>
    tpu.vector_store %arg14[%c1, %c0_4], %3 {strides = array<i32>} : memref<24x128xf32, #tpu.memory_space<vmem>>, vector<16x48xf32>,
    %cst_5 = arith.constant 0.000000e+00 : f32
    %5 = vector.broadcast %cst_5 : f32 to vector<1x48xf32>
    %c17 = arith.constant 17 : index
    %c0_6 = arith.constant 0 : index
    %6 = vector.load %arg14[%c17, %c0_6] : memref<24x128xf32, #tpu.memory_space<vmem>>, vector<1x48xf32>
    tpu.vector_store %arg14[%c17, %c0_6], %5 {strides = array<i32>} : memref<24x128xf32, #tpu.memory_space<vmem>>, vector<1x48xf32>,
    %c0_7 = arith.constant 0 : index
    %c0_8 = arith.constant 0 : index
    %7 = vector.load %arg14[%c0_7, %c0_8] : memref<24x128xf32, #tpu.memory_space<vmem>>, vector<16x48xf32>
    %c1_9 = arith.constant 1 : index
    %c0_10 = arith.constant 0 : index
    %8 = vector.load %arg14[%c1_9, %c0_10] : memref<24x128xf32, #tpu.memory_space<vmem>>, vector<16x48xf32>
    %c2 = arith.constant 2 : index
    %c0_11 = arith.constant 0 : index
    %9 = vector.load %arg14[%c2, %c0_11] : memref<24x128xf32, #tpu.memory_space<vmem>>, vector<16x48xf32>
    %10 = tpu.concatenate %7, %8, %9 in 1 : vector<16x48xf32>, vector<16x48xf32>, vector<16x48xf32> -> vector<16x144xf32>
    %c0_12 = arith.constant 0 : index
    %c0_13 = arith.constant 0 : index
    %11 = vector.load %arg2[%c0_12, %c0_13] : memref<144x128xf32, #tpu.memory_space<vmem>>, vector<144x128xf32>
    %cst_14 = arith.constant dense<0.000000e+00> : vector<16x128xf32>
    %12 = tpu.matmul %10, %11, %cst_14 {dimension_numbers = #tpu.dot_dimension_numbers<[1], [0], [0], [1], [0, 0, 1, 1], [], []>} : vector<16x144xf32>, vector<144x128xf32>, vector<16x128xf32> -> vector<16x128xf32>
    %c0_15 = arith.constant 0 : index
    %c0_16 = arith.constant 0 : index
    %13 = vector.load %arg10[%c0_15, %c0_16] : memref<6x256xf32, #tpu.memory_space<vmem>>, vector<1x128xf32>
    %14 = vector.broadcast %13 : vector<1x128xf32> to vector<16x128xf32>
    %15 = arith.addf %12, %14 : vector<16x128xf32>
    %cst_17 = arith.constant 0.000000e+00 : f32
    %16 = vector.broadcast %cst_17 : f32 to vector<16x128xf32>
    %17 = arith.maximumf %15, %16 : vector<16x128xf32>
    %c0_18 = arith.constant 0 : index
    %c0_19 = arith.constant 0 : index
    %c0_20 = arith.constant 0 : index
    %18 = vector.load %arg8[%c0_18, %c0_19, %c0_20] : memref<3x8x16xf32, #tpu.memory_space<vmem>>, vector<1x8x16xf32>
    %19 = vector.shape_cast %18 : vector<1x8x16xf32> to vector<8x16xf32>
    %cst_21 = arith.constant dense<0.000000e+00> : vector<8x128xf32>
    %20 = tpu.matmul %19, %17, %cst_21 {dimension_numbers = #tpu.dot_dimension_numbers<[1], [0], [0], [1], [0, 0, 1, 1], [], []>} : vector<8x16xf32>, vector<16x128xf32>, vector<8x128xf32> -> vector<8x128xf32>
    %c1_22 = arith.constant 1 : index
    %c0_23 = arith.constant 0 : index
    %c0_24 = arith.constant 0 : index
    %21 = vector.load %arg8[%c1_22, %c0_23, %c0_24] : memref<3x8x16xf32, #tpu.memory_space<vmem>>, vector<1x8x16xf32>
    %22 = vector.shape_cast %21 : vector<1x8x16xf32> to vector<8x16xf32>
    %cst_25 = arith.constant dense<0.000000e+00> : vector<8x128xf32>
    %23 = tpu.matmul %22, %17, %cst_25 {dimension_numbers = #tpu.dot_dimension_numbers<[1], [0], [0], [1], [0, 0, 1, 1], [], []>} : vector<8x16xf32>, vector<16x128xf32>, vector<8x128xf32> -> vector<8x128xf32>
    %c2_26 = arith.constant 2 : index
    %c0_27 = arith.constant 0 : index
    %c0_28 = arith.constant 0 : index
    %24 = vector.load %arg8[%c2_26, %c0_27, %c0_28] : memref<3x8x16xf32, #tpu.memory_space<vmem>>, vector<1x8x16xf32>
    %25 = vector.shape_cast %24 : vector<1x8x16xf32> to vector<8x16xf32>
    %cst_29 = arith.constant dense<0.000000e+00> : vector<8x128xf32>
    %26 = tpu.matmul %25, %17, %cst_29 {dimension_numbers = #tpu.dot_dimension_numbers<[1], [0], [0], [1], [0, 0, 1, 1], [], []>} : vector<8x16xf32>, vector<16x128xf32>, vector<8x128xf32> -> vector<8x128xf32>
    %27 = tpu.concatenate %20, %23, %26 in 1 : vector<8x128xf32>, vector<8x128xf32>, vector<8x128xf32> -> vector<8x384xf32>
    %c0_30 = arith.constant 0 : index
    %c0_31 = arith.constant 0 : index
    %28 = vector.load %arg3[%c0_30, %c0_31] : memref<384x128xf32, #tpu.memory_space<vmem>>, vector<384x128xf32>
    %cst_32 = arith.constant dense<0.000000e+00> : vector<8x128xf32>
    %29 = tpu.matmul %27, %28, %cst_32 {dimension_numbers = #tpu.dot_dimension_numbers<[1], [0], [0], [1], [0, 0, 1, 1], [], []>} : vector<8x384xf32>, vector<384x128xf32>, vector<8x128xf32> -> vector<8x128xf32>
    %c1_33 = arith.constant 1 : index
    %c0_34 = arith.constant 0 : index
    %30 = vector.load %arg10[%c1_33, %c0_34] : memref<6x256xf32, #tpu.memory_space<vmem>>, vector<1x128xf32>
    %31 = vector.broadcast %30 : vector<1x128xf32> to vector<8x128xf32>
    %32 = arith.addf %29, %31 : vector<8x128xf32>
    %cst_35 = arith.constant 0.000000e+00 : f32
    %33 = vector.broadcast %cst_35 : f32 to vector<8x128xf32>
    %34 = arith.maximumf %32, %33 : vector<8x128xf32>
    %c1_36 = arith.constant 1 : index
    %c0_37 = arith.constant 0 : index
    %35 = vector.load %arg14[%c1_36, %c0_37] : memref<24x128xf32, #tpu.memory_space<vmem>>, vector<8x128xf32>
    tpu.vector_store %arg14[%c1_36, %c0_37], %34 {strides = array<i32>} : memref<24x128xf32, #tpu.memory_space<vmem>>, vector<8x128xf32>,
    %cst_38 = arith.constant 0.000000e+00 : f32
    %36 = vector.broadcast %cst_38 : f32 to vector<1x128xf32>
    %c9 = arith.constant 9 : index
    %c0_39 = arith.constant 0 : index
    %37 = vector.load %arg14[%c9, %c0_39] : memref<24x128xf32, #tpu.memory_space<vmem>>, vector<1x128xf32>
    tpu.vector_store %arg14[%c9, %c0_39], %36 {strides = array<i32>} : memref<24x128xf32, #tpu.memory_space<vmem>>, vector<1x128xf32>,
    %c0_40 = arith.constant 0 : index
    %c0_41 = arith.constant 0 : index
    %38 = vector.load %arg14[%c0_40, %c0_41] : memref<24x128xf32, #tpu.memory_space<vmem>>, vector<8x128xf32>
    %c1_42 = arith.constant 1 : index
    %c0_43 = arith.constant 0 : index
    %39 = vector.load %arg14[%c1_42, %c0_43] : memref<24x128xf32, #tpu.memory_space<vmem>>, vector<8x128xf32>
    %c2_44 = arith.constant 2 : index
    %c0_45 = arith.constant 0 : index
    %40 = vector.load %arg14[%c2_44, %c0_45] : memref<24x128xf32, #tpu.memory_space<vmem>>, vector<8x128xf32>
    %41 = tpu.concatenate %38, %39, %40 in 1 : vector<8x128xf32>, vector<8x128xf32>, vector<8x128xf32> -> vector<8x384xf32>
    %c0_46 = arith.constant 0 : index
    %c0_47 = arith.constant 0 : index
    %42 = vector.load %arg4[%c0_46, %c0_47] : memref<384x256xf32, #tpu.memory_space<vmem>>, vector<384x256xf32>
    %cst_48 = arith.constant dense<0.000000e+00> : vector<8x256xf32>
    %43 = tpu.matmul %41, %42, %cst_48 {dimension_numbers = #tpu.dot_dimension_numbers<[1], [0], [0], [1], [0, 0, 1, 1], [], []>} : vector<8x384xf32>, vector<384x256xf32>, vector<8x256xf32> -> vector<8x256xf32>
    %c2_49 = arith.constant 2 : index
    %c0_50 = arith.constant 0 : index
    %44 = vector.load %arg10[%c2_49, %c0_50] : memref<6x256xf32, #tpu.memory_space<vmem>>, vector<1x256xf32>
    %45 = vector.broadcast %44 : vector<1x256xf32> to vector<8x256xf32>
    %46 = arith.addf %43, %45 : vector<8x256xf32>
    %47 = vector.extract_strided_slice %46 {offsets = [0, 128], sizes = [8, 128], strides = [1, 1]} : vector<8x256xf32> to vector<8x128xf32>
    %c0_51 = arith.constant 0 : index
    %c0_52 = arith.constant 0 : index
    %c0_53 = arith.constant 0 : index
    %48 = vector.load %arg11[%c0_51, %c0_52, %c0_53] : memref<1x8x128xf32, #tpu.memory_space<vmem>>, vector<1x8x128xf32>
    %49 = vector.shape_cast %48 : vector<1x8x128xf32> to vector<8x128xf32>
    %50 = vector.shape_cast %47 : vector<8x128xf32> to vector<1x8x128xf32>
    tpu.vector_store %arg11[%c0_51, %c0_52, %c0_53], %50 {strides = array<i32>} : memref<1x8x128xf32, #tpu.memory_space<vmem>>, vector<1x8x128xf32>,
    %51 = vector.extract_strided_slice %46 {offsets = [0, 0], sizes = [8, 128], strides = [1, 1]} : vector<8x256xf32> to vector<8x128xf32>
    %cst_54 = arith.constant 0.000000e+00 : f32
    %52 = vector.broadcast %cst_54 : f32 to vector<8x128xf32>
    %53 = arith.maximumf %51, %52 : vector<8x128xf32>
    %c1_55 = arith.constant 1 : index
    %c0_56 = arith.constant 0 : index
    %54 = vector.load %arg14[%c1_55, %c0_56] : memref<24x128xf32, #tpu.memory_space<vmem>>, vector<8x128xf32>
    tpu.vector_store %arg14[%c1_55, %c0_56], %53 {strides = array<i32>} : memref<24x128xf32, #tpu.memory_space<vmem>>, vector<8x128xf32>,
    %cst_57 = arith.constant 0.000000e+00 : f32
    %55 = vector.broadcast %cst_57 : f32 to vector<1x128xf32>
    %c9_58 = arith.constant 9 : index
    %c0_59 = arith.constant 0 : index
    %56 = vector.load %arg14[%c9_58, %c0_59] : memref<24x128xf32, #tpu.memory_space<vmem>>, vector<1x128xf32>
    tpu.vector_store %arg14[%c9_58, %c0_59], %55 {strides = array<i32>} : memref<24x128xf32, #tpu.memory_space<vmem>>, vector<1x128xf32>,
    %c0_60 = arith.constant 0 : index
    %c0_61 = arith.constant 0 : index
    %57 = vector.load %arg14[%c0_60, %c0_61] : memref<24x128xf32, #tpu.memory_space<vmem>>, vector<8x128xf32>
    %c1_62 = arith.constant 1 : index
    %c0_63 = arith.constant 0 : index
    %58 = vector.load %arg14[%c1_62, %c0_63] : memref<24x128xf32, #tpu.memory_space<vmem>>, vector<8x128xf32>
    %c2_64 = arith.constant 2 : index
    %c0_65 = arith.constant 0 : index
    %59 = vector.load %arg14[%c2_64, %c0_65] : memref<24x128xf32, #tpu.memory_space<vmem>>, vector<8x128xf32>
    %60 = tpu.concatenate %57, %58, %59 in 1 : vector<8x128xf32>, vector<8x128xf32>, vector<8x128xf32> -> vector<8x384xf32>
    %c0_66 = arith.constant 0 : index
    %c0_67 = arith.constant 0 : index
    %61 = vector.load %arg5[%c0_66, %c0_67] : memref<384x128xf32, #tpu.memory_space<vmem>>, vector<384x128xf32>
    %cst_68 = arith.constant dense<0.000000e+00> : vector<8x128xf32>
    %62 = tpu.matmul %60, %61, %cst_68 {dimension_numbers = #tpu.dot_dimension_numbers<[1], [0], [0], [1], [0, 0, 1, 1], [], []>} : vector<8x384xf32>, vector<384x128xf32>, vector<8x128xf32> -> vector<8x128xf32>
    %c3 = arith.constant 3 : index
    %c0_69 = arith.constant 0 : index
    %63 = vector.load %arg10[%c3, %c0_69] : memref<6x256xf32, #tpu.memory_space<vmem>>, vector<1x128xf32>
    %64 = vector.broadcast %63 : vector<1x128xf32> to vector<8x128xf32>
    %65 = arith.addf %62, %64 : vector<8x128xf32>
    %c0_70 = arith.constant 0 : index
    %c0_71 = arith.constant 0 : index
    %c0_72 = arith.constant 0 : index
    %66 = vector.load %arg12[%c0_70, %c0_71, %c0_72] : memref<1x8x128xf32, #tpu.memory_space<vmem>>, vector<1x8x128xf32>
    %67 = vector.shape_cast %66 : vector<1x8x128xf32> to vector<8x128xf32>
    %68 = vector.shape_cast %65 : vector<8x128xf32> to vector<1x8x128xf32>
    tpu.vector_store %arg12[%c0_70, %c0_71, %c0_72], %68 {strides = array<i32>} : memref<1x8x128xf32, #tpu.memory_space<vmem>>, vector<1x8x128xf32>,
    %c0_73 = arith.constant 0 : index
    %c0_74 = arith.constant 0 : index
    %c0_75 = arith.constant 0 : index
    %69 = vector.load %arg9[%c0_73, %c0_74, %c0_75] : memref<3x4x8xf32, #tpu.memory_space<vmem>>, vector<1x4x8xf32>
    %70 = vector.shape_cast %69 : vector<1x4x8xf32> to vector<4x8xf32>
    %cst_76 = arith.constant dense<0.000000e+00> : vector<4x128xf32>
    %71 = tpu.matmul %70, %53, %cst_76 {dimension_numbers = #tpu.dot_dimension_numbers<[1], [0], [0], [1], [0, 0, 1, 1], [], []>} : vector<4x8xf32>, vector<8x128xf32>, vector<4x128xf32> -> vector<4x128xf32>
    %c1_77 = arith.constant 1 : index
    %c0_78 = arith.constant 0 : index
    %c0_79 = arith.constant 0 : index
    %72 = vector.load %arg9[%c1_77, %c0_78, %c0_79] : memref<3x4x8xf32, #tpu.memory_space<vmem>>, vector<1x4x8xf32>
    %73 = vector.shape_cast %72 : vector<1x4x8xf32> to vector<4x8xf32>
    %cst_80 = arith.constant dense<0.000000e+00> : vector<4x128xf32>
    %74 = tpu.matmul %73, %53, %cst_80 {dimension_numbers = #tpu.dot_dimension_numbers<[1], [0], [0], [1], [0, 0, 1, 1], [], []>} : vector<4x8xf32>, vector<8x128xf32>, vector<4x128xf32> -> vector<4x128xf32>
    %c2_81 = arith.constant 2 : index
    %c0_82 = arith.constant 0 : index
    %c0_83 = arith.constant 0 : index
    %75 = vector.load %arg9[%c2_81, %c0_82, %c0_83] : memref<3x4x8xf32, #tpu.memory_space<vmem>>, vector<1x4x8xf32>
    %76 = vector.shape_cast %75 : vector<1x4x8xf32> to vector<4x8xf32>
    %cst_84 = arith.constant dense<0.000000e+00> : vector<4x128xf32>
    %77 = tpu.matmul %76, %53, %cst_84 {dimension_numbers = #tpu.dot_dimension_numbers<[1], [0], [0], [1], [0, 0, 1, 1], [], []>} : vector<4x8xf32>, vector<8x128xf32>, vector<4x128xf32> -> vector<4x128xf32>
    %78 = tpu.concatenate %71, %74, %77 in 1 : vector<4x128xf32>, vector<4x128xf32>, vector<4x128xf32> -> vector<4x384xf32>
    %c0_85 = arith.constant 0 : index
    %c0_86 = arith.constant 0 : index
    %79 = vector.load %arg6[%c0_85, %c0_86] : memref<384x64xf32, #tpu.memory_space<vmem>>, vector<384x64xf32>
    %cst_87 = arith.constant dense<0.000000e+00> : vector<4x64xf32>
    %80 = tpu.matmul %78, %79, %cst_87 {dimension_numbers = #tpu.dot_dimension_numbers<[1], [0], [0], [1], [0, 0, 1, 1], [], []>} : vector<4x384xf32>, vector<384x64xf32>, vector<4x64xf32> -> vector<4x64xf32>
    %c4 = arith.constant 4 : index
    %c0_88 = arith.constant 0 : index
    %81 = vector.load %arg10[%c4, %c0_88] : memref<6x256xf32, #tpu.memory_space<vmem>>, vector<1x64xf32>
    %82 = vector.broadcast %81 : vector<1x64xf32> to vector<4x64xf32>
    %83 = arith.addf %80, %82 : vector<4x64xf32>
    %cst_89 = arith.constant 0.000000e+00 : f32
    %84 = vector.broadcast %cst_89 : f32 to vector<4x64xf32>
    %85 = arith.maximumf %83, %84 : vector<4x64xf32>
    %c1_90 = arith.constant 1 : index
    %c0_91 = arith.constant 0 : index
    %86 = vector.load %arg14[%c1_90, %c0_91] : memref<24x128xf32, #tpu.memory_space<vmem>>, vector<4x64xf32>
    tpu.vector_store %arg14[%c1_90, %c0_91], %85 {strides = array<i32>} : memref<24x128xf32, #tpu.memory_space<vmem>>, vector<4x64xf32>,
    %cst_92 = arith.constant 0.000000e+00 : f32
    %87 = vector.broadcast %cst_92 : f32 to vector<1x64xf32>
    %c5 = arith.constant 5 : index
    %c0_93 = arith.constant 0 : index
    %88 = vector.load %arg14[%c5, %c0_93] : memref<24x128xf32, #tpu.memory_space<vmem>>, vector<1x64xf32>
    tpu.vector_store %arg14[%c5, %c0_93], %87 {strides = array<i32>} : memref<24x128xf32, #tpu.memory_space<vmem>>, vector<1x64xf32>,
    %c0_94 = arith.constant 0 : index
    %c0_95 = arith.constant 0 : index
    %89 = vector.load %arg14[%c0_94, %c0_95] : memref<24x128xf32, #tpu.memory_space<vmem>>, vector<4x64xf32>
    %c1_96 = arith.constant 1 : index
    %c0_97 = arith.constant 0 : index
    %90 = vector.load %arg14[%c1_96, %c0_97] : memref<24x128xf32, #tpu.memory_space<vmem>>, vector<4x64xf32>
    %c2_98 = arith.constant 2 : index
    %c0_99 = arith.constant 0 : index
    %91 = vector.load %arg14[%c2_98, %c0_99] : memref<24x128xf32, #tpu.memory_space<vmem>>, vector<4x64xf32>
    %92 = tpu.concatenate %89, %90, %91 in 1 : vector<4x64xf32>, vector<4x64xf32>, vector<4x64xf32> -> vector<4x192xf32>
    %c0_100 = arith.constant 0 : index
    %c0_101 = arith.constant 0 : index
    %93 = vector.load %arg7[%c0_100, %c0_101] : memref<192x128xf32, #tpu.memory_space<vmem>>, vector<192x128xf32>
    %cst_102 = arith.constant dense<0.000000e+00> : vector<4x128xf32>
    %94 = tpu.matmul %92, %93, %cst_102 {dimension_numbers = #tpu.dot_dimension_numbers<[1], [0], [0], [1], [0, 0, 1, 1], [], []>} : vector<4x192xf32>, vector<192x128xf32>, vector<4x128xf32> -> vector<4x128xf32>
    %c5_103 = arith.constant 5 : index
    %c0_104 = arith.constant 0 : index
    %95 = vector.load %arg10[%c5_103, %c0_104] : memref<6x256xf32, #tpu.memory_space<vmem>>, vector<1x128xf32>
    %96 = vector.broadcast %95 : vector<1x128xf32> to vector<4x128xf32>
    %97 = arith.addf %94, %96 : vector<4x128xf32>
    %c0_105 = arith.constant 0 : index
    %c0_106 = arith.constant 0 : index
    %c0_107 = arith.constant 0 : index
    %98 = vector.load %arg13[%c0_105, %c0_106, %c0_107] : memref<1x4x128xf32, #tpu.memory_space<vmem>>, vector<1x4x128xf32>
    %99 = vector.shape_cast %98 : vector<1x4x128xf32> to vector<4x128xf32>
    %100 = vector.shape_cast %97 : vector<4x128xf32> to vector<1x4x128xf32>
    tpu.vector_store %arg13[%c0_105, %c0_106, %c0_107], %100 {strides = array<i32>} : memref<1x4x128xf32, #tpu.memory_space<vmem>>, vector<1x4x128xf32>,
    return
  }
  func.func @transform_0(%arg0: i32) -> (i32, i32, i32) {
    %c0_i32 = arith.constant 0 : i32
    %c0_i32_0 = arith.constant 0 : i32
    %c0_i32_1 = arith.constant 0 : i32
    return %arg0, %c0_i32, %c0_i32_0 : i32, i32, i32
  }
  func.func @transform_1(%arg0: i32) -> (i32, i32) {
    %c0_i32 = arith.constant 0 : i32
    %c0_i32_0 = arith.constant 0 : i32
    %c0_i32_1 = arith.constant 0 : i32
    return %c0_i32, %c0_i32_0 : i32, i32
  }
  func.func @transform_2(%arg0: i32) -> (i32, i32) {
    %c0_i32 = arith.constant 0 : i32
    %c0_i32_0 = arith.constant 0 : i32
    %c0_i32_1 = arith.constant 0 : i32
    return %c0_i32, %c0_i32_0 : i32, i32
  }
  func.func @transform_3(%arg0: i32) -> (i32, i32) {
    %c0_i32 = arith.constant 0 : i32
    %c0_i32_0 = arith.constant 0 : i32
    %c0_i32_1 = arith.constant 0 : i32
    return %c0_i32, %c0_i32_0 : i32, i32
  }
  func.func @transform_4(%arg0: i32) -> (i32, i32) {
    %c0_i32 = arith.constant 0 : i32
    %c0_i32_0 = arith.constant 0 : i32
    %c0_i32_1 = arith.constant 0 : i32
    return %c0_i32, %c0_i32_0 : i32, i32
  }
  func.func @transform_5(%arg0: i32) -> (i32, i32) {
    %c0_i32 = arith.constant 0 : i32
    %c0_i32_0 = arith.constant 0 : i32
    %c0_i32_1 = arith.constant 0 : i32
    return %c0_i32, %c0_i32_0 : i32, i32
  }
  func.func @transform_6(%arg0: i32) -> (i32, i32) {
    %c0_i32 = arith.constant 0 : i32
    %c0_i32_0 = arith.constant 0 : i32
    %c0_i32_1 = arith.constant 0 : i32
    return %c0_i32, %c0_i32_0 : i32, i32
  }
  func.func @transform_7(%arg0: i32) -> (i32, i32, i32) {
    %c0_i32 = arith.constant 0 : i32
    %c0_i32_0 = arith.constant 0 : i32
    %c0_i32_1 = arith.constant 0 : i32
    %c0_i32_2 = arith.constant 0 : i32
    return %c0_i32, %c0_i32_0, %c0_i32_1 : i32, i32, i32
  }
  func.func @transform_8(%arg0: i32) -> (i32, i32, i32) {
    %c0_i32 = arith.constant 0 : i32
    %c0_i32_0 = arith.constant 0 : i32
    %c0_i32_1 = arith.constant 0 : i32
    %c0_i32_2 = arith.constant 0 : i32
    return %c0_i32, %c0_i32_0, %c0_i32_1 : i32, i32, i32
  }
  func.func @transform_9(%arg0: i32) -> (i32, i32) {
    %c0_i32 = arith.constant 0 : i32
    %c0_i32_0 = arith.constant 0 : i32
    %c0_i32_1 = arith.constant 0 : i32
    return %c0_i32, %c0_i32_0 : i32, i32
  }
  func.func @transform_10(%arg0: i32) -> (i32, i32, i32) {
    %c0_i32 = arith.constant 0 : i32
    %c0_i32_0 = arith.constant 0 : i32
    %c0_i32_1 = arith.constant 0 : i32
    return %arg0, %c0_i32, %c0_i32_0 : i32, i32, i32
  }
  func.func @transform_11(%arg0: i32) -> (i32, i32, i32) {
    %c0_i32 = arith.constant 0 : i32
    %c0_i32_0 = arith.constant 0 : i32
    %c0_i32_1 = arith.constant 0 : i32
    return %arg0, %c0_i32, %c0_i32_0 : i32, i32, i32
  }
  func.func @transform_12(%arg0: i32) -> (i32, i32, i32) {
    %c0_i32 = arith.constant 0 : i32
    %c0_i32_0 = arith.constant 0 : i32
    %c0_i32_1 = arith.constant 0 : i32
    return %arg0, %c0_i32, %c0_i32_0 : i32, i32, i32
  }
}

</mosaic_0001>

<llo_original>
// kernel: tpu_custom_call.1
$region0: #{tpu_custom_call.1}
  #allocation0 [shape = 'u32[]', space=smem, size = 0x4, offset = 0x4, fixed_abs, tag = 'smem constant byte address 0x4 - core index']
  #allocation1 [shape = 'u32[144,128]{1,0:T(1,128)}', space=vmem, size = 0x12000, scoped, tag = 'internal scratch']
  #allocation2 [shape = 'f32[24,128]{1,0:T(8,128)}', space=vmem, size = 0x3000, scoped, tag = 'scratch operand']
  %s0 = inlined_call_operand.hbm [shape: f32[2,16,48], index: 0, kind: input, shape index: {}]
  %s1 = inlined_call_operand.hbm [shape: f32[144,128], index: 1, kind: input, shape index: {}]
  %s2 = inlined_call_operand.vmem [shape: f32[384,128], index: 2, kind: input, shape index: {}]
  %s3 = inlined_call_operand.hbm [shape: f32[384,256], index: 3, kind: input, shape index: {}]
  %s4 = inlined_call_operand.hbm [shape: f32[384,128], index: 4, kind: input, shape index: {}]
  %s5 = inlined_call_operand.vmem [shape: f32[384,64], index: 5, kind: input, shape index: {}]
  %s6 = inlined_call_operand.vmem [shape: f32[192,128], index: 6, kind: input, shape index: {}]
  %s7 = inlined_call_operand.hbm [shape: f32[3,8,16], index: 7, kind: input, shape index: {}]
  %s8 = inlined_call_operand.vmem [shape: f32[3,4,8], index: 8, kind: input, shape index: {}]
  %s9 = inlined_call_operand.vmem [shape: f32[6,256], index: 9, kind: input, shape index: {}]
  %s10 = inlined_call_operand.hbm [shape: f32[2,8,128], index: 10, kind: output, shape index: {0}]
  %s11 = inlined_call_operand.hbm [shape: f32[2,8,128], index: 11, kind: output, shape index: {1}]
  %s12 = inlined_call_operand.hbm [shape: f32[2,4,128], index: 12, kind: output, shape index: {2}]
  %13 = xla_tuple %s10, %s11, %s12
  %s14 = sld [smem:[#allocation0]]
  $region109: #{tpu_custom_call.1} parent=0
    _
  %s16 = ssub.s32 1, %s14
  %s17 = scalar_select 0, %s16, %s14
  $region1: #{tpu_custom_call.1} parent=0
    #allocation3 [shape = 'u8[16384]{0}', space=vmem, size = 0x4000, scoped, tag = 'input window, operand 0']
    #allocation4 [shape = 's32[2]{0}', space=sflag, size = 0x8, scoped, tag = 'scoped memory for tpu_custom_call.1']
    #allocation5 [shape = 's32[2]{0}', space=sflag, size = 0x8, scoped, tag = 'scoped memory for tpu_custom_call.1']
    #allocation6 [shape = 'u8[73728]{0}', space=vmem, size = 0x12000, scoped, tag = 'input window, operand 1, single buffered']
    #allocation7 [shape = 's32[1]{0}', space=sflag, size = 0x4, scoped, tag = 'scoped memory for tpu_custom_call.1']
    #allocation8 [shape = 'u8[393216]{0}', space=vmem, size = 0x60000, scoped, tag = 'input window, operand 3, single buffered']
    #allocation9 [shape = 'u8[196608]{0}', space=vmem, size = 0x30000, scoped, tag = 'input window, operand 4, single buffered']
    #allocation10 [shape = 's32[1]{0}', space=sflag, size = 0x4, scoped, tag = 'scoped memory for tpu_custom_call.1']
    #allocation11 [shape = 'u8[12288]{0}', space=vmem, size = 0x3000, scoped, tag = 'input window, operand 7, single buffered']
    #allocation12 [shape = 'u8[8192]{0}', space=vmem, size = 0x2000, scoped, tag = 'output window, operand 0']
    #allocation13 [shape = 'u8[8192]{0}', space=vmem, size = 0x2000, scoped, tag = 'output window, operand 1']
    #allocation14 [shape = 's32[2]{0}', space=sflag, size = 0x8, scoped, tag = 'scoped memory for tpu_custom_call.1']
    #allocation15 [shape = 'u8[4096]{0}', space=vmem, size = 0x1000, scoped, tag = 'output window, operand 2']
    %18 = vsyncpa [#allocation4], 0
    %s19 = scalar_lea.sflag [#allocation4], 1
    %20 = vsyncpa %s19, 0
    %21 = vsyncpa [#allocation7], 0
    %22 = vsyncpa [#allocation10], 0
    %23 = vsyncpa [#allocation5], 0
    %s24 = scalar_lea.sflag [#allocation5], 1
    %25 = vsyncpa %s24, 0
    %26 = vsyncpa [#allocation14], 0
    %s27 = scalar_lea.sflag [#allocation14], 1
    %28 = vsyncpa %s27, 0
    loop: start=0, step=1, limit=4
    $region2: #{tpu_custom_call.1} parent=1 // loop_pre_header
      _
    $region3: #{tpu_custom_call.1} parent=1 // loop_header
      %s30 = sphi 0, %s34
      %p31 = scmp.ge.s32.totalorder %s30, 4
      %s40 = sphi 0, %s42
      %s43 = sphi 0, %s40
      %s44 = sphi 0, %s43
      %s60 = sphi 0, %s44
      %s64 = sphi 0, %s64
      %s66 = sphi 0, %s64
      %s67 = sphi 0, %s66
      %s81 = sphi 0, %s67
      %s85 = sphi 0, %s85
      %s87 = sphi 0, %s85
      %s88 = sphi 0, %s87
      %s102 = sphi 0, %s88
      %s106 = sphi 0, %s106
      %s108 = sphi 0, %s106
      %s109 = sphi 0, %s108
      %s123 = sphi 0, %s109
      %s127 = sphi 0, %s127
      %s129 = sphi 0, %s127
      %s130 = sphi 0, %s129
      %s144 = sphi 0, %s130
      %s148 = sphi 0, %s148
      %s150 = sphi 0, %s148
      %s151 = sphi 0, %s150
      %s165 = sphi 0, %s151
      %s169 = sphi 0, %s169
      %s171 = sphi 0, %s169
      %s172 = sphi 0, %s171
      %s186 = sphi 0, %s172
      %s190 = sphi 0, %s190
      %s192 = sphi 0, %s190
      %s193 = sphi 0, %s192
      %s207 = sphi 0, %s193
      %s211 = sphi 0, %s211
      %s213 = sphi 0, %s211
      %s214 = sphi 0, %s213
      %s228 = sphi 0, %s214
      %s232 = sphi 0, %s232
      %s234 = sphi 0, %s232
      %s235 = sphi 0, %s234
      %s249 = sphi 0, %s235
      %s255 = sphi 0, %s257
      %s258 = sphi 0, %s255
      %s259 = sphi 0, %s258
      %s275 = sphi 0, %s259
      %s281 = sphi 0, %s283
      %s284 = sphi 0, %s281
      %s285 = sphi 0, %s284
      %s301 = sphi 0, %s285
      %s307 = sphi 0, %s309
      %s310 = sphi 0, %s307
      %s311 = sphi 0, %s310
      %s327 = sphi 0, %s311
    $region4: #{tpu_custom_call.1} parent=1 // loop_header_branch
      %33 = sbr.rel (%p31) target = $region8
    $region5: #{tpu_custom_call.1} parent=1 // loop_body
      %s35 = ssub.s32 %s30, 1
      %s36 = ssub.s32 %s30, 2
      %s37 = sadd.s32 %s30, 1
      %s38 = ssub.s32 %s30, %s37
      %p39 = scmp.eq.s32.totalorder %s38, 0
      %s41 = sadd.s32 %s40, 1
      %s42 = scalar_select %p39, %s40, %s41
      %p45 = pneg %p39
      %p46 = scmp.eq.s32.totalorder %s30, 1
      %p47 = por %p45, %p46
      %p48 = scmp.ne.s32.totalorder %s40, %s43
      %p49 = scmp.eq.s32.totalorder %s30, 0
      %p50 = por %p48, %p49
      %p51 = scmp.ne.s32.totalorder %s40, %s43
      %p52 = scmp.eq.s32.totalorder %s35, 1
      %p53 = por %p51, %p52
      %p54 = scmp.ne.s32.totalorder %s43, %s44
      %p55 = scmp.eq.s32.totalorder %s35, 0
      %p56 = por %p54, %p55
      %p57 = scmp.ne.s32.totalorder %s43, %s44
      %p58 = scmp.eq.s32.totalorder %s36, 1
      %p59 = por %p57, %p58
      %p61 = scmp.ne.s32.totalorder %s44, %s60
      %p62 = scmp.eq.s32.totalorder %s36, 0
      %p63 = por %p61, %p62
      %s65 = sadd.s32 %s64, 1
      %p68 = scmp.eq.s32.totalorder %s30, 1
      %p69 = scmp.ne.s32.totalorder %s64, %s66
      %p70 = scmp.eq.s32.totalorder %s30, 0
      %p71 = por %p69, %p70
      %p72 = scmp.ne.s32.totalorder %s64, %s66
      %p73 = scmp.eq.s32.totalorder %s35, 1
      %p74 = por %p72, %p73
      %p75 = scmp.ne.s32.totalorder %s66, %s67
      %p76 = scmp.eq.s32.totalorder %s35, 0
      %p77 = por %p75, %p76
      %p78 = scmp.ne.s32.totalorder %s66, %s67
      %p79 = scmp.eq.s32.totalorder %s36, 1
      %p80 = por %p78, %p79
      %p82 = scmp.ne.s32.totalorder %s67, %s81
      %p83 = scmp.eq.s32.totalorder %s36, 0
      %p84 = por %p82, %p83
      %s86 = sadd.s32 %s85, 1
      %p89 = scmp.eq.s32.totalorder %s30, 1
      %p90 = scmp.ne.s32.totalorder %s85, %s87
      %p91 = scmp.eq.s32.totalorder %s30, 0
      %p92 = por %p90, %p91
      %p93 = scmp.ne.s32.totalorder %s85, %s87
      %p94 = scmp.eq.s32.totalorder %s35, 1
      %p95 = por %p93, %p94
      %p96 = scmp.ne.s32.totalorder %s87, %s88
      %p97 = scmp.eq.s32.totalorder %s35, 0
      %p98 = por %p96, %p97
      %p99 = scmp.ne.s32.totalorder %s87, %s88
      %p100 = scmp.eq.s32.totalorder %s36, 1
      %p101 = por %p99, %p100
      %p103 = scmp.ne.s32.totalorder %s88, %s102
      %p104 = scmp.eq.s32.totalorder %s36, 0
      %p105 = por %p103, %p104
      %s107 = sadd.s32 %s106, 1
      %p110 = scmp.eq.s32.totalorder %s30, 1
      %p111 = scmp.ne.s32.totalorder %s106, %s108
      %p112 = scmp.eq.s32.totalorder %s30, 0
      %p113 = por %p111, %p112
      %p114 = scmp.ne.s32.totalorder %s106, %s108
      %p115 = scmp.eq.s32.totalorder %s35, 1
      %p116 = por %p114, %p115
      %p117 = scmp.ne.s32.totalorder %s108, %s109
      %p118 = scmp.eq.s32.totalorder %s35, 0
      %p119 = por %p117, %p118
      %p120 = scmp.ne.s32.totalorder %s108, %s109
      %p121 = scmp.eq.s32.totalorder %s36, 1
      %p122 = por %p120, %p121
      %p124 = scmp.ne.s32.totalorder %s109, %s123
      %p125 = scmp.eq.s32.totalorder %s36, 0
      %p126 = por %p124, %p125
      %s128 = sadd.s32 %s127, 1
      %p131 = scmp.eq.s32.totalorder %s30, 1
      %p132 = scmp.ne.s32.totalorder %s127, %s129
      %p133 = scmp.eq.s32.totalorder %s30, 0
      %p134 = por %p132, %p133
      %p135 = scmp.ne.s32.totalorder %s127, %s129
      %p136 = scmp.eq.s32.totalorder %s35, 1
      %p137 = por %p135, %p136
      %p138 = scmp.ne.s32.totalorder %s129, %s130
      %p139 = scmp.eq.s32.totalorder %s35, 0
      %p140 = por %p138, %p139
      %p141 = scmp.ne.s32.totalorder %s129, %s130
      %p142 = scmp.eq.s32.totalorder %s36, 1
      %p143 = por %p141, %p142
      %p145 = scmp.ne.s32.totalorder %s130, %s144
      %p146 = scmp.eq.s32.totalorder %s36, 0
      %p147 = por %p145, %p146
      %s149 = sadd.s32 %s148, 1
      %p152 = scmp.eq.s32.totalorder %s30, 1
      %p153 = scmp.ne.s32.totalorder %s148, %s150
      %p154 = scmp.eq.s32.totalorder %s30, 0
      %p155 = por %p153, %p154
      %p156 = scmp.ne.s32.totalorder %s148, %s150
      %p157 = scmp.eq.s32.totalorder %s35, 1
      %p158 = por %p156, %p157
      %p159 = scmp.ne.s32.totalorder %s150, %s151
      %p160 = scmp.eq.s32.totalorder %s35, 0
      %p161 = por %p159, %p160
      %p162 = scmp.ne.s32.totalorder %s150, %s151
      %p163 = scmp.eq.s32.totalorder %s36, 1
      %p164 = por %p162, %p163
      %p166 = scmp.ne.s32.totalorder %s151, %s165
      %p167 = scmp.eq.s32.totalorder %s36, 0
      %p168 = por %p166, %p167
      %s170 = sadd.s32 %s169, 1
      %p173 = scmp.eq.s32.totalorder %s30, 1
      %p174 = scmp.ne.s32.totalorder %s169, %s171
      %p175 = scmp.eq.s32.totalorder %s30, 0
      %p176 = por %p174, %p175
      %p177 = scmp.ne.s32.totalorder %s169, %s171
      %p178 = scmp.eq.s32.totalorder %s35, 1
      %p179 = por %p177, %p178
      %p180 = scmp.ne.s32.totalorder %s171, %s172
      %p181 = scmp.eq.s32.totalorder %s35, 0
      %p182 = por %p180, %p181
      %p183 = scmp.ne.s32.totalorder %s171, %s172
      %p184 = scmp.eq.s32.totalorder %s36, 1
      %p185 = por %p183, %p184
      %p187 = scmp.ne.s32.totalorder %s172, %s186
      %p188 = scmp.eq.s32.totalorder %s36, 0
      %p189 = por %p187, %p188
      %s191 = sadd.s32 %s190, 1
      %p194 = scmp.eq.s32.totalorder %s30, 1
      %p195 = scmp.ne.s32.totalorder %s190, %s192
      %p196 = scmp.eq.s32.totalorder %s30, 0
      %p197 = por %p195, %p196
      %p198 = scmp.ne.s32.totalorder %s190, %s192
      %p199 = scmp.eq.s32.totalorder %s35, 1
      %p200 = por %p198, %p199
      %p201 = scmp.ne.s32.totalorder %s192, %s193
      %p202 = scmp.eq.s32.totalorder %s35, 0
      %p203 = por %p201, %p202
      %p204 = scmp.ne.s32.totalorder %s192, %s193
      %p205 = scmp.eq.s32.totalorder %s36, 1
      %p206 = por %p204, %p205
      %p208 = scmp.ne.s32.totalorder %s193, %s207
      %p209 = scmp.eq.s32.totalorder %s36, 0
      %p210 = por %p208, %p209
      %s212 = sadd.s32 %s211, 1
      %p215 = scmp.eq.s32.totalorder %s30, 1
      %p216 = scmp.ne.s32.totalorder %s211, %s213
      %p217 = scmp.eq.s32.totalorder %s30, 0
      %p218 = por %p216, %p217
      %p219 = scmp.ne.s32.totalorder %s211, %s213
      %p220 = scmp.eq.s32.totalorder %s35, 1
      %p221 = por %p219, %p220
      %p222 = scmp.ne.s32.totalorder %s213, %s214
      %p223 = scmp.eq.s32.totalorder %s35, 0
      %p224 = por %p222, %p223
      %p225 = scmp.ne.s32.totalorder %s213, %s214
      %p226 = scmp.eq.s32.totalorder %s36, 1
      %p227 = por %p225, %p226
      %p229 = scmp.ne.s32.totalorder %s214, %s228
      %p230 = scmp.eq.s32.totalorder %s36, 0
      %p231 = por %p229, %p230
      %s233 = sadd.s32 %s232, 1
      %p236 = scmp.eq.s32.totalorder %s30, 1
      %p237 = scmp.ne.s32.totalorder %s232, %s234
      %p238 = scmp.eq.s32.totalorder %s30, 0
      %p239 = por %p237, %p238
      %p240 = scmp.ne.s32.totalorder %s232, %s234
      %p241 = scmp.eq.s32.totalorder %s35, 1
      %p242 = por %p240, %p241
      %p243 = scmp.ne.s32.totalorder %s234, %s235
      %p244 = scmp.eq.s32.totalorder %s35, 0
      %p245 = por %p243, %p244
      %p246 = scmp.ne.s32.totalorder %s234, %s235
      %p247 = scmp.eq.s32.totalorder %s36, 1
      %p248 = por %p246, %p247
      %p250 = scmp.ne.s32.totalorder %s235, %s249
      %p251 = scmp.eq.s32.totalorder %s36, 0
      %p252 = por %p250, %p251
      %s253 = ssub.s32 %s30, %s37
      %p254 = scmp.eq.s32.totalorder %s253, 0
      %s256 = sadd.s32 %s255, 1
      %s257 = scalar_select %p254, %s255, %s256
      %p260 = pneg %p254
      %p261 = scmp.eq.s32.totalorder %s30, 1
      %p262 = por %p260, %p261
      %p263 = scmp.ne.s32.totalorder %s255, %s258
      %p264 = scmp.eq.s32.totalorder %s30, 0
      %p265 = por %p263, %p264
      %p266 = scmp.ne.s32.totalorder %s255, %s258
      %p267 = scmp.eq.s32.totalorder %s35, 1
      %p268 = por %p266, %p267
      %p269 = scmp.ne.s32.totalorder %s258, %s259
      %p270 = scmp.eq.s32.totalorder %s35, 0
      %p271 = por %p269, %p270
      %p272 = scmp.ne.s32.totalorder %s258, %s259
      %p273 = scmp.eq.s32.totalorder %s36, 1
      %p274 = por %p272, %p273
      %p276 = scmp.ne.s32.totalorder %s259, %s275
      %p277 = scmp.eq.s32.totalorder %s36, 0
      %p278 = por %p276, %p277
      %s279 = ssub.s32 %s30, %s37
      %p280 = scmp.eq.s32.totalorder %s279, 0
      %s282 = sadd.s32 %s281, 1
      %s283 = scalar_select %p280, %s281, %s282
      %p286 = pneg %p280
      %p287 = scmp.eq.s32.totalorder %s30, 1
      %p288 = por %p286, %p287
      %p289 = scmp.ne.s32.totalorder %s281, %s284
      %p290 = scmp.eq.s32.totalorder %s30, 0
      %p291 = por %p289, %p290
      %p292 = scmp.ne.s32.totalorder %s281, %s284
      %p293 = scmp.eq.s32.totalorder %s35, 1
      %p294 = por %p292, %p293
      %p295 = scmp.ne.s32.totalorder %s284, %s285
      %p296 = scmp.eq.s32.totalorder %s35, 0
      %p297 = por %p295, %p296
      %p298 = scmp.ne.s32.totalorder %s284, %s285
      %p299 = scmp.eq.s32.totalorder %s36, 1
      %p300 = por %p298, %p299
      %p302 = scmp.ne.s32.totalorder %s285, %s301
      %p303 = scmp.eq.s32.totalorder %s36, 0
      %p304 = por %p302, %p303
      %s305 = ssub.s32 %s30, %s37
      %p306 = scmp.eq.s32.totalorder %s305, 0
      %s308 = sadd.s32 %s307, 1
      %s309 = scalar_select %p306, %s307, %s308
      %p312 = pneg %p306
      %p313 = scmp.eq.s32.totalorder %s30, 1
      %p314 = por %p312, %p313
      %p315 = scmp.ne.s32.totalorder %s307, %s310
      %p316 = scmp.eq.s32.totalorder %s30, 0
      %p317 = por %p315, %p316
      %p318 = scmp.ne.s32.totalorder %s307, %s310
      %p319 = scmp.eq.s32.totalorder %s35, 1
      %p320 = por %p318, %p319
      %p321 = scmp.ne.s32.totalorder %s310, %s311
      %p322 = scmp.eq.s32.totalorder %s35, 0
      %p323 = por %p321, %p322
      %p324 = scmp.ne.s32.totalorder %s310, %s311
      %p325 = scmp.eq.s32.totalorder %s36, 1
      %p326 = por %p324, %p325
      %p328 = scmp.ne.s32.totalorder %s311, %s327
      %p329 = scmp.eq.s32.totalorder %s36, 0
      %p330 = por %p328, %p329
      %p331 = scmp.le.s32.totalorder 1, %s30
      %p332 = scmp.lt.s32.totalorder %s30, 3
      %p333 = pnand %p331, %p332
      %p334 = pneg %p333
      // Predicated region
      $region9: #{tpu_custom_call.1} parent=5 // pred_check
        _
      $region10: #{tpu_custom_call.1} parent=5 // pred_check_branch
        %336 = sbr.rel (%p333) target = $region12
      $region11: #{tpu_custom_call.1} parent=5 // pred_region
        %s337 = ssub.s32 %s30, 1
        // Predicated region
        $region13: #{tpu_custom_call.1} parent=11 // pred_check
          %p338 = pneg %p77
        $region14: #{tpu_custom_call.1} parent=11 // pred_check_branch
          %340 = sbr.rel (%p338) target = $region16
        $region15: #{tpu_custom_call.1} parent=11 // pred_region
          %s342 = ssub.s32 2304, 2304
          %343 = vsyncadd [#allocation7], %s342
          %s344 = sshll.u32 [#allocation6], 4
          %s345 = int_to_ptr.vmem [resolvable:$true] %s344
          %350 = dma.hbm_to_vmem [thread:$0]  %s1, 2304, %s345, [#allocation7], 128, 128, 8
        $region16: #{tpu_custom_call.1} parent=11 // pred_fallthru
          _
        // Predicated region
        $region17: #{tpu_custom_call.1} parent=11 // pred_check
          %p351 = pneg %p98
        $region18: #{tpu_custom_call.1} parent=11 // pred_check_branch
          %353 = sbr.rel (%p351) target = $region20
        $region19: #{tpu_custom_call.1} parent=11 // pred_region
          _
        $region20: #{tpu_custom_call.1} parent=11 // pred_fallthru
          _
        // Predicated region
        $region21: #{tpu_custom_call.1} parent=11 // pred_check
          %p354 = pneg %p119
        $region22: #{tpu_custom_call.1} parent=11 // pred_check_branch
          %356 = sbr.rel (%p354) target = $region24
        $region23: #{tpu_custom_call.1} parent=11 // pred_region
          %s358 = ssub.s32 12288, 12288
          %359 = vsyncadd [#allocation7], %s358
          %s360 = sshll.u32 [#allocation8], 4
          %s361 = int_to_ptr.vmem [resolvable:$true] %s360
          %366 = dma.hbm_to_vmem [thread:$0]  %s3, 12288, %s361, [#allocation7], 256, 256, 16
        $region24: #{tpu_custom_call.1} parent=11 // pred_fallthru
          _
        // Predicated region
        $region25: #{tpu_custom_call.1} parent=11 // pred_check
          %p367 = pneg %p140
        $region26: #{tpu_custom_call.1} parent=11 // pred_check_branch
          %369 = sbr.rel (%p367) target = $region28
        $region27: #{tpu_custom_call.1} parent=11 // pred_region
          %s371 = ssub.s32 6144, 6144
          %372 = vsyncadd [#allocation10], %s371
          %s373 = sshll.u32 [#allocation9], 4
          %s374 = int_to_ptr.vmem [resolvable:$true] %s373
          %379 = dma.hbm_to_vmem [thread:$0]  %s4, 6144, %s374, [#allocation10], 128, 128, 8
        $region28: #{tpu_custom_call.1} parent=11 // pred_fallthru
          _
        // Predicated region
        $region29: #{tpu_custom_call.1} parent=11 // pred_check
          %p380 = pneg %p161
        $region30: #{tpu_custom_call.1} parent=11 // pred_check_branch
          %382 = sbr.rel (%p380) target = $region32
        $region31: #{tpu_custom_call.1} parent=11 // pred_region
          _
        $region32: #{tpu_custom_call.1} parent=11 // pred_fallthru
          _
        // Predicated region
        $region33: #{tpu_custom_call.1} parent=11 // pred_check
          %p383 = pneg %p182
        $region34: #{tpu_custom_call.1} parent=11 // pred_check_branch
          %385 = sbr.rel (%p383) target = $region36
        $region35: #{tpu_custom_call.1} parent=11 // pred_region
          _
        $region36: #{tpu_custom_call.1} parent=11 // pred_fallthru
          _
        // Predicated region
        $region37: #{tpu_custom_call.1} parent=11 // pred_check
          %p386 = pneg %p203
        $region38: #{tpu_custom_call.1} parent=11 // pred_check_branch
          %388 = sbr.rel (%p386) target = $region40
        $region39: #{tpu_custom_call.1} parent=11 // pred_region
          %s390 = ssub.s32 384, 384
          %391 = vsyncadd [#allocation10], %s390
          %s392 = sshll.u32 [#allocation11], 4
          %s393 = int_to_ptr.vmem [resolvable:$true] %s392
          %398 = dma.hbm_to_vmem [thread:$0]  %s7, 384, %s393, [#allocation10], 128, 128, 8
        $region40: #{tpu_custom_call.1} parent=11 // pred_fallthru
          _
        // Predicated region
        $region41: #{tpu_custom_call.1} parent=11 // pred_check
          %p399 = pneg %p224
        $region42: #{tpu_custom_call.1} parent=11 // pred_check_branch
          %401 = sbr.rel (%p399) target = $region44
        $region43: #{tpu_custom_call.1} parent=11 // pred_region
          _
        $region44: #{tpu_custom_call.1} parent=11 // pred_fallthru
          _
        // Predicated region
        $region45: #{tpu_custom_call.1} parent=11 // pred_check
          %p402 = pneg %p245
        $region46: #{tpu_custom_call.1} parent=11 // pred_check_branch
          %404 = sbr.rel (%p402) target = $region48
        $region47: #{tpu_custom_call.1} parent=11 // pred_region
          _
        $region48: #{tpu_custom_call.1} parent=11 // pred_fallthru
          _
      $region12: #{tpu_custom_call.1} parent=5 // pred_fallthru
        _
      %p405 = scmp.lt.s32.totalorder %s30, 2
      // Predicated region
      $region49: #{tpu_custom_call.1} parent=5 // pred_check
        %p406 = pneg %p405
      $region50: #{tpu_custom_call.1} parent=5 // pred_check_branch
        %408 = sbr.rel (%p406) target = $region52
      $region51: #{tpu_custom_call.1} parent=5 // pred_region
        // Predicated region
        $region53: #{tpu_custom_call.1} parent=51 // pred_check
          %p409 = pneg %p50
        $region54: #{tpu_custom_call.1} parent=51 // pred_check_branch
          %411 = sbr.rel (%p409) target = $region56
        $region55: #{tpu_custom_call.1} parent=51 // pred_region
          %s412 = sand.u32 %s40, 1
          %s413 = scalar_lea.sflag [#allocation4], %s412
          %s414 = sand.u32 %s40, 1
          %s415 = smul.addr %s414, 16
          %s416 = scalar_lea.vmem [#allocation3], %s415
          %s418 = ssub.s32 256, 256
          %419 = vsyncadd %s413, %s418
          %s420 = smul.addr %s30, 2
          %s421 = smul.addr %s420, 128
          %s422 = scalar_lea.hbm %s0, %s421
          %s423 = sshll.u32 %s416, 4
          %s424 = int_to_ptr.vmem [resolvable:$true] %s423
          %429 = dma.hbm_to_vmem [thread:$0]  %s422, 256, %s424, %s413, 128, 128, 8
        $region56: #{tpu_custom_call.1} parent=51 // pred_fallthru
          _
      $region52: #{tpu_custom_call.1} parent=5 // pred_fallthru
        _
      %p430 = scmp.le.s32.totalorder 1, %s30
      %p431 = scmp.lt.s32.totalorder %s30, 3
      %p432 = pnand %p430, %p431
      %p433 = pneg %p432
      // Predicated region
      $region57: #{tpu_custom_call.1} parent=5 // pred_check
        _
      $region58: #{tpu_custom_call.1} parent=5 // pred_check_branch
        %435 = sbr.rel (%p432) target = $region60
      $region59: #{tpu_custom_call.1} parent=5 // pred_region
        %s436 = ssub.s32 %s30, 1
        %s437 = sand.u32 %s43, 1
        %s438 = scalar_lea.sflag [#allocation4], %s437
        %s439 = sand.u32 %s43, 1
        %s440 = smul.addr %s439, 16
        %s441 = scalar_lea.vmem [#allocation3], %s440
        // Predicated region
        $region61: #{tpu_custom_call.1} parent=59 // pred_check
          %p442 = pneg %p56
        $region62: #{tpu_custom_call.1} parent=59 // pred_check_branch
          %444 = sbr.rel (%p442) target = $region64
        $region63: #{tpu_custom_call.1} parent=59 // pred_region
          %445 = dma.done %s438, 256
        $region64: #{tpu_custom_call.1} parent=59 // pred_fallthru
          _
        // Predicated region
        $region65: #{tpu_custom_call.1} parent=59 // pred_check
          %p446 = pneg %p77
        $region66: #{tpu_custom_call.1} parent=59 // pred_check_branch
          %448 = sbr.rel (%p446) target = $region68
        $region67: #{tpu_custom_call.1} parent=59 // pred_region
          %449 = dma.done [#allocation7], 2304
        $region68: #{tpu_custom_call.1} parent=59 // pred_fallthru
          _
        // Predicated region
        $region69: #{tpu_custom_call.1} parent=59 // pred_check
          %p450 = pneg %p119
        $region70: #{tpu_custom_call.1} parent=59 // pred_check_branch
          %452 = sbr.rel (%p450) target = $region72
        $region71: #{tpu_custom_call.1} parent=59 // pred_region
          %453 = dma.done [#allocation7], 12288
        $region72: #{tpu_custom_call.1} parent=59 // pred_fallthru
          _
        // Predicated region
        $region73: #{tpu_custom_call.1} parent=59 // pred_check
          %p454 = pneg %p140
        $region74: #{tpu_custom_call.1} parent=59 // pred_check_branch
          %456 = sbr.rel (%p454) target = $region76
        $region75: #{tpu_custom_call.1} parent=59 // pred_region
          %457 = dma.done [#allocation10], 6144
        $region76: #{tpu_custom_call.1} parent=59 // pred_fallthru
          _
        // Predicated region
        $region77: #{tpu_custom_call.1} parent=59 // pred_check
          %p458 = pneg %p203
        $region78: #{tpu_custom_call.1} parent=59 // pred_check_branch
          %460 = sbr.rel (%p458) target = $region80
        $region79: #{tpu_custom_call.1} parent=59 // pred_region
          %461 = dma.done [#allocation10], 384
        $region80: #{tpu_custom_call.1} parent=59 // pred_fallthru
          _
        %s462 = sand.u32 %s43, 1
        %s463 = scalar_lea.sflag [#allocation4], %s462
        %s464 = sand.u32 %s43, 1
        %s465 = smul.addr %s464, 16
        %s466 = scalar_lea.vmem [#allocation3], %s465
        %p467 = pneg %p56
        %p468 = pneg %p53
        %p469 = pneg %p77
        %p470 = pneg %p74
        %p471 = pneg %p98
        %p472 = pneg %p95
        %p473 = pneg %p119
        %p474 = pneg %p116
        %p475 = pneg %p140
        %p476 = pneg %p137
        %p477 = pneg %p161
        %p478 = pneg %p158
        %p479 = pneg %p182
        %p480 = pneg %p179
        %p481 = pneg %p203
        %p482 = pneg %p200
        %p483 = pneg %p224
        %p484 = pneg %p221
        %p485 = pneg %p245
        %p486 = pneg %p242
        %p487 = pneg %p271
        %p488 = pneg %p268
        %s489 = sand.u32 %s258, 1
        %s490 = scalar_lea.sflag [#allocation5], %s489
        %s491 = sand.u32 %s258, 1
        %s492 = smul.addr %s491, 8
        %s493 = scalar_lea.vmem [#allocation12], %s492
        %p494 = pneg %p297
        %p495 = pneg %p294
        %s496 = sand.u32 %s35, 1
        %s497 = scalar_lea.sflag [#allocation14], %s496
        %s498 = sand.u32 %s284, 1
        %s499 = smul.addr %s498, 8
        %s500 = scalar_lea.vmem [#allocation13], %s499
        %p501 = pneg %p323
        %p502 = pneg %p320
        %s503 = sand.u32 %s35, 1
        %s504 = scalar_lea.sflag [#allocation14], %s503
        %s505 = sand.u32 %s310, 1
        %s506 = smul.addr %s505, 4
        %s507 = scalar_lea.vmem [#allocation15], %s506
        %508 = vst [vmem:[#allocation2] sm:$0x1] 0.0
        %v509 = vld [vmem:[%s441] sm:$0xff]
        %v510 = vld [vmem:[%s441 + $0x8] sm:$0xff]
        %vm511 = vcmask 392192
        %512 = vst.msk [vmem:[#allocation2 + $0x1] sm:$0xff] %vm511, %v509
        %513 = vst.msk [vmem:[#allocation2 + $0x9] sm:$0xff] %vm511, %v510
        %vm514 = vcmask 385024
        %515 = vst.msk [vmem:[#allocation2 + $0x11] sm:$0x1] %vm514, 0.0
        %v516 = vld [vmem:[#allocation2] sm:$0xff]
        %v517 = vld [vmem:[#allocation2 + $0x8] sm:$0xff]
        %v518 = vld [vmem:[#allocation2 + $0x1] sm:$0xff]
        %v519 = vld [vmem:[#allocation2 + $0x9] sm:$0xff]
        %v520 = vld [vmem:[#allocation2 + $0x2] sm:$0xff]
        %v521 = vld [vmem:[#allocation2 + $0xa] sm:$0xff]
        %524 = vrot.lane.b32.xlu0 %v518, 48
        %v525 = vpop.permute.xlu0 %524
        %526 = vrot.lane.b32.xlu0 %v519, 48
        %v527 = vpop.permute.xlu0 %526
        %532 = vrot.lane.b32.xlu0 %v520, 96
        %v533 = vpop.permute.xlu0 %532
        %534 = vrot.lane.b32.xlu0 %v521, 96
        %v535 = vpop.permute.xlu0 %534
        %v538 = vsel %vm511, %v516, %v525
        %v539 = vsel %vm511, %v517, %v527
        %vm540 = vcmask 785408
        %v541 = vsel %vm540, %v538, %v533
        %v542 = vsel %vm540, %v539, %v535
        %v543 = vld [vmem:[#allocation6] sm:$0xff]
        %v544 = vld [vmem:[#allocation6 + $0x8] sm:$0xff]
        %v545 = vld [vmem:[#allocation6 + $0x10] sm:$0xff]
        %v546 = vld [vmem:[#allocation6 + $0x18] sm:$0xff]
        %v547 = vld [vmem:[#allocation6 + $0x20] sm:$0xff]
        %v548 = vld [vmem:[#allocation6 + $0x28] sm:$0xff]
        %v549 = vld [vmem:[#allocation6 + $0x30] sm:$0xff]
        %v550 = vld [vmem:[#allocation6 + $0x38] sm:$0xff]
        %v551 = vld [vmem:[#allocation6 + $0x40] sm:$0xff]
        %v552 = vld [vmem:[#allocation6 + $0x48] sm:$0xff]
        %v553 = vld [vmem:[#allocation6 + $0x50] sm:$0xff]
        %v554 = vld [vmem:[#allocation6 + $0x58] sm:$0xff]
        %v555 = vld [vmem:[#allocation6 + $0x60] sm:$0xff]
        %v556 = vld [vmem:[#allocation6 + $0x68] sm:$0xff]
        %v557 = vld [vmem:[#allocation6 + $0x70] sm:$0xff]
        %v558 = vld [vmem:[#allocation6 + $0x78] sm:$0xff]
        %v559 = vld [vmem:[#allocation6 + $0x80] sm:$0xff]
        %v560 = vld [vmem:[#allocation6 + $0x88] sm:$0xff]
        %v561 = vld [vmem:[%s9] ss:$0 sm:$0xff]
        %vm562 = vcmask 130048
        %v563 = vsel %vm562, %v533, 0
        %v565 = vsel %vm562, %v535, 0
        %567 = vmatprep.subr.mxu0 0.0
        %568 = vmatpush1.msra.mxu0 %v543
        %569 = vmatprep.subr.mxu0 0.0
        %570 = vmatpush1.msra.mxu0 %v544
        %571 = vmatprep.subr.mxu0 0.0
        %572 = vmatpush1.msra.mxu0 %v545
        %573 = vmatprep.subr.mxu0 0.0
        %574 = vmatpush1.msra.mxu0 %v546
        %575 = vmatprep.subr.mxu0 0.0
        %576 = vmatpush1.msra.mxu0 %v547
        %577 = vmatprep.subr.mxu0 0.0
        %578 = vmatpush1.msra.mxu0 %v548
        %579 = vmatprep.subr.mxu0 0.0
        %580 = vmatpush1.msra.mxu0 %v549
        %581 = vmatprep.subr.mxu0 0.0
        %582 = vmatpush1.msra.mxu0 %v550
        %583 = vmatprep.subr.mxu0 0.0
        %584 = vmatpush1.msra.mxu0 %v551
        %585 = vmatprep.subr.mxu0 0.0
        %586 = vmatpush1.msra.mxu0 %v552
        %587 = vmatprep.subr.mxu0 0.0
        %588 = vmatpush1.msra.mxu0 %v553
        %589 = vmatprep.subr.mxu0 0.0
        %590 = vmatpush1.msra.mxu0 %v554
        %591 = vmatprep.subr.mxu0 0.0
        %592 = vmatpush1.msra.mxu0 %v555
        %593 = vmatprep.subr.mxu0 0.0
        %594 = vmatpush1.msra.mxu0 %v556
        %595 = vmatprep.subr.mxu0 0.0
        %596 = vmatpush1.msra.mxu0 %v557
        %597 = vmatprep.subr.mxu0 0.0
        %598 = vmatpush1.msra.mxu0 %v558
        %599 = vmatprep.subr.mxu0 0.0
        %600 = vmatpush1.msra.mxu0 %v559
        %601 = vmatprep.subr.mxu0 0.0
        %602 = vmatpush1.msra.mxu0 %v560
        %603 = vmatprep.subr.mxu0 0.0
        %604 = vmatpush1.msra.mxu0 0.0
        %605 = vmatprep.subr.mxu0 0.0
        %606 = vmatpush1.msra.mxu0 0.0
        %607 = vmatprep.subr.mxu0 0.0
        %608 = vmatpush1.msra.mxu0 0.0
        %609 = vmatprep.subr.mxu0 0.0
        %610 = vmatpush1.msra.mxu0 0.0
        %611 = vmatprep.subr.mxu0 0.0
        %612 = vmatpush1.msra.mxu0 0.0
        %613 = vmatprep.subr.mxu0 0.0
        %614 = vmatpush1.msra.mxu0 0.0
        %615 = vmatprep.subr.mxu0 0.0
        %616 = vmatpush1.msra.mxu0 0.0
        %617 = vmatprep.subr.mxu0 0.0
        %618 = vmatpush1.msra.mxu0 0.0
        %619 = vmatprep.subr.mxu0 0.0
        %620 = vmatpush1.msra.mxu0 0.0
        %621 = vmatprep.subr.mxu0 0.0
        %622 = vmatpush1.msra.mxu0 0.0
        %623 = vmatprep.subr.mxu0 0.0
        %624 = vmatpush1.msra.mxu0 0.0
        %625 = vmatprep.subr.mxu0 0.0
        %626 = vmatpush1.msra.mxu0 0.0
        %627 = vmatprep.subr.mxu0 0.0
        %628 = vmatpush1.msra.mxu0 0.0
        %629 = vmatprep.subr.mxu0 0.0
        %630 = vmatpush1.msra.mxu0 0.0
        %631 = vmatprep.mubr.f32.mxu0 %v563
        %632 = vmatmul.mubr.f32.gmra.mrb[0].mxu0 %v541
        %v633 = vpop.f32.mrb[0].mxu0
        %v634 = vadd.f32 %v561, %v633
        %v635 = vpop.f32.mrb[0].mxu0
        %636 = vmatprep.mubr.f32.mxu0 %v565
        %637 = vmatmul.mubr.f32.gmra.mrb[0].mxu0 %v542
        %v638 = vpop.f32.mrb[0].mxu0
        %v639 = vadd.f32 %v561, %v638
        %v640 = vpop.f32.mrb[0].mxu0
        %641 = vdwg.mxu0
        %v642 = vmax.f32 %v634, 0.0
        %v643 = vmax.f32 %v639, 0.0
        %v644 = vld [vmem:[#allocation11] sm:$0xff]
        %v646 = vsel %vm562, %v644, 0
        %648 = vmatprep.subr.mxu0 0.0
        %649 = vmatpush1.msra.mxu0 %v642
        %650 = vmatprep.subr.mxu0 0.0
        %651 = vmatpush1.msra.mxu0 %v643
        %652 = vmatprep.subr.mxu0 0.0
        %653 = vmatpush1.msra.mxu0 0.0
        %654 = vmatprep.subr.mxu0 0.0
        %655 = vmatpush1.msra.mxu0 0.0
        %656 = vmatprep.subr.mxu0 0.0
        %657 = vmatpush1.msra.mxu0 0.0
        %658 = vmatprep.subr.mxu0 0.0
        %659 = vmatpush1.msra.mxu0 0.0
        %660 = vmatprep.subr.mxu0 0.0
        %661 = vmatpush1.msra.mxu0 0.0
        %662 = vmatprep.subr.mxu0 0.0
        %663 = vmatpush1.msra.mxu0 0.0
        %664 = vmatprep.subr.mxu0 0.0
        %665 = vmatpush1.msra.mxu0 0.0
        %666 = vmatprep.subr.mxu0 0.0
        %667 = vmatpush1.msra.mxu0 0.0
        %668 = vmatprep.subr.mxu0 0.0
        %669 = vmatpush1.msra.mxu0 0.0
        %670 = vmatprep.subr.mxu0 0.0
        %671 = vmatpush1.msra.mxu0 0.0
        %672 = vmatprep.subr.mxu0 0.0
        %673 = vmatpush1.msra.mxu0 0.0
        %674 = vmatprep.subr.mxu0 0.0
        %675 = vmatpush1.msra.mxu0 0.0
        %676 = vmatprep.subr.mxu0 0.0
        %677 = vmatpush1.msra.mxu0 0.0
        %678 = vmatprep.subr.mxu0 0.0
        %679 = vmatpush1.msra.mxu0 0.0
        %680 = vmatprep.subr.mxu0 0.0
        %681 = vmatpush1.msra.mxu0 0.0
        %682 = vmatprep.subr.mxu0 0.0
        %683 = vmatpush1.msra.mxu0 0.0
        %684 = vmatprep.subr.mxu0 0.0
        %685 = vmatpush1.msra.mxu0 0.0
        %686 = vmatprep.subr.mxu0 0.0
        %687 = vmatpush1.msra.mxu0 0.0
        %688 = vmatprep.subr.mxu0 0.0
        %689 = vmatpush1.msra.mxu0 0.0
        %690 = vmatprep.subr.mxu0 0.0
        %691 = vmatpush1.msra.mxu0 0.0
        %692 = vmatprep.subr.mxu0 0.0
        %693 = vmatpush1.msra.mxu0 0.0
        %694 = vmatprep.subr.mxu0 0.0
        %695 = vmatpush1.msra.mxu0 0.0
        %696 = vmatprep.subr.mxu0 0.0
        %697 = vmatpush1.msra.mxu0 0.0
        %698 = vmatprep.subr.mxu0 0.0
        %699 = vmatpush1.msra.mxu0 0.0
        %700 = vmatprep.subr.mxu0 0.0
        %701 = vmatpush1.msra.mxu0 0.0
        %702 = vmatprep.subr.mxu0 0.0
        %703 = vmatpush1.msra.mxu0 0.0
        %704 = vmatprep.subr.mxu0 0.0
        %705 = vmatpush1.msra.mxu0 0.0
        %706 = vmatprep.subr.mxu0 0.0
        %707 = vmatpush1.msra.mxu0 0.0
        %708 = vmatprep.subr.mxu0 0.0
        %709 = vmatpush1.msra.mxu0 0.0
        %710 = vmatprep.subr.mxu0 0.0
        %711 = vmatpush1.msra.mxu0 0.0
        %712 = vmatprep.mubr.f32.mxu0 0.0
        %713 = vmatmul.mubr.f32.gmra.mrb[0].mxu0 %v646
        %v714 = vpop.f32.mrb[0].mxu0
        %v715 = vadd.f32 0.0, %v714
        %v716 = vpop.f32.mrb[0].mxu0
        %717 = vdwg.mxu0
        %s718 = scalar_lea.vmem [#allocation11], 8
        %v719 = vld [vmem:[%s718] sm:$0xff]
        %v721 = vsel %vm562, %v719, 0
        %723 = vmatprep.subr.mxu0 0.0
        %724 = vmatpush1.msra.mxu0 %v642
        %725 = vmatprep.subr.mxu0 0.0
        %726 = vmatpush1.msra.mxu0 %v643
        %727 = vmatprep.subr.mxu0 0.0
        %728 = vmatpush1.msra.mxu0 0.0
        %729 = vmatprep.subr.mxu0 0.0
        %730 = vmatpush1.msra.mxu0 0.0
        %731 = vmatprep.subr.mxu0 0.0
        %732 = vmatpush1.msra.mxu0 0.0
        %733 = vmatprep.subr.mxu0 0.0
        %734 = vmatpush1.msra.mxu0 0.0
        %735 = vmatprep.subr.mxu0 0.0
        %736 = vmatpush1.msra.mxu0 0.0
        %737 = vmatprep.subr.mxu0 0.0
        %738 = vmatpush1.msra.mxu0 0.0
        %739 = vmatprep.subr.mxu0 0.0
        %740 = vmatpush1.msra.mxu0 0.0
        %741 = vmatprep.subr.mxu0 0.0
        %742 = vmatpush1.msra.mxu0 0.0
        %743 = vmatprep.subr.mxu0 0.0
        %744 = vmatpush1.msra.mxu0 0.0
        %745 = vmatprep.subr.mxu0 0.0
        %746 = vmatpush1.msra.mxu0 0.0
        %747 = vmatprep.subr.mxu0 0.0
        %748 = vmatpush1.msra.mxu0 0.0
        %749 = vmatprep.subr.mxu0 0.0
        %750 = vmatpush1.msra.mxu0 0.0
        %751 = vmatprep.subr.mxu0 0.0
        %752 = vmatpush1.msra.mxu0 0.0
        %753 = vmatprep.subr.mxu0 0.0
        %754 = vmatpush1.msra.mxu0 0.0
        %755 = vmatprep.subr.mxu0 0.0
        %756 = vmatpush1.msra.mxu0 0.0
        %757 = vmatprep.subr.mxu0 0.0
        %758 = vmatpush1.msra.mxu0 0.0
        %759 = vmatprep.subr.mxu0 0.0
        %760 = vmatpush1.msra.mxu0 0.0
        %761 = vmatprep.subr.mxu0 0.0
        %762 = vmatpush1.msra.mxu0 0.0
        %763 = vmatprep.subr.mxu0 0.0
        %764 = vmatpush1.msra.mxu0 0.0
        %765 = vmatprep.subr.mxu0 0.0
        %766 = vmatpush1.msra.mxu0 0.0
        %767 = vmatprep.subr.mxu0 0.0
        %768 = vmatpush1.msra.mxu0 0.0
        %769 = vmatprep.subr.mxu0 0.0
        %770 = vmatpush1.msra.mxu0 0.0
        %771 = vmatprep.subr.mxu0 0.0
        %772 = vmatpush1.msra.mxu0 0.0
        %773 = vmatprep.subr.mxu0 0.0
        %774 = vmatpush1.msra.mxu0 0.0
        %775 = vmatprep.subr.mxu0 0.0
        %776 = vmatpush1.msra.mxu0 0.0
        %777 = vmatprep.subr.mxu0 0.0
        %778 = vmatpush1.msra.mxu0 0.0
        %779 = vmatprep.subr.mxu0 0.0
        %780 = vmatpush1.msra.mxu0 0.0
        %781 = vmatprep.subr.mxu0 0.0
        %782 = vmatpush1.msra.mxu0 0.0
        %783 = vmatprep.subr.mxu0 0.0
        %784 = vmatpush1.msra.mxu0 0.0
        %785 = vmatprep.subr.mxu0 0.0
        %786 = vmatpush1.msra.mxu0 0.0
        %787 = vmatprep.mubr.f32.mxu0 0.0
        %788 = vmatmul.mubr.f32.gmra.mrb[0].mxu0 %v721
        %v789 = vpop.f32.mrb[0].mxu0
        %v790 = vadd.f32 0.0, %v789
        %v791 = vpop.f32.mrb[0].mxu0
        %792 = vdwg.mxu0
        %s793 = scalar_lea.vmem [#allocation11], 16
        %v794 = vld [vmem:[%s793] sm:$0xff]
        %v796 = vsel %vm562, %v794, 0
        %798 = vmatprep.subr.mxu0 0.0
        %799 = vmatpush1.msra.mxu0 %v642
        %800 = vmatprep.subr.mxu0 0.0
        %801 = vmatpush1.msra.mxu0 %v643
        %802 = vmatprep.subr.mxu0 0.0
        %803 = vmatpush1.msra.mxu0 0.0
        %804 = vmatprep.subr.mxu0 0.0
        %805 = vmatpush1.msra.mxu0 0.0
        %806 = vmatprep.subr.mxu0 0.0
        %807 = vmatpush1.msra.mxu0 0.0
        %808 = vmatprep.subr.mxu0 0.0
        %809 = vmatpush1.msra.mxu0 0.0
        %810 = vmatprep.subr.mxu0 0.0
        %811 = vmatpush1.msra.mxu0 0.0
        %812 = vmatprep.subr.mxu0 0.0
        %813 = vmatpush1.msra.mxu0 0.0
        %814 = vmatprep.subr.mxu0 0.0
        %815 = vmatpush1.msra.mxu0 0.0
        %816 = vmatprep.subr.mxu0 0.0
        %817 = vmatpush1.msra.mxu0 0.0
        %818 = vmatprep.subr.mxu0 0.0
        %819 = vmatpush1.msra.mxu0 0.0
        %820 = vmatprep.subr.mxu0 0.0
        %821 = vmatpush1.msra.mxu0 0.0
        %822 = vmatprep.subr.mxu0 0.0
        %823 = vmatpush1.msra.mxu0 0.0
        %824 = vmatprep.subr.mxu0 0.0
        %825 = vmatpush1.msra.mxu0 0.0
        %826 = vmatprep.subr.mxu0 0.0
        %827 = vmatpush1.msra.mxu0 0.0
        %828 = vmatprep.subr.mxu0 0.0
        %829 = vmatpush1.msra.mxu0 0.0
        %830 = vmatprep.subr.mxu0 0.0
        %831 = vmatpush1.msra.mxu0 0.0
        %832 = vmatprep.subr.mxu0 0.0
        %833 = vmatpush1.msra.mxu0 0.0
        %834 = vmatprep.subr.mxu0 0.0
        %835 = vmatpush1.msra.mxu0 0.0
        %836 = vmatprep.subr.mxu0 0.0
        %837 = vmatpush1.msra.mxu0 0.0
        %838 = vmatprep.subr.mxu0 0.0
        %839 = vmatpush1.msra.mxu0 0.0
        %840 = vmatprep.subr.mxu0 0.0
        %841 = vmatpush1.msra.mxu0 0.0
        %842 = vmatprep.subr.mxu0 0.0
        %843 = vmatpush1.msra.mxu0 0.0
        %844 = vmatprep.subr.mxu0 0.0
        %845 = vmatpush1.msra.mxu0 0.0
        %846 = vmatprep.subr.mxu0 0.0
        %847 = vmatpush1.msra.mxu0 0.0
        %848 = vmatprep.subr.mxu0 0.0
        %849 = vmatpush1.msra.mxu0 0.0
        %850 = vmatprep.subr.mxu0 0.0
        %851 = vmatpush1.msra.mxu0 0.0
        %852 = vmatprep.subr.mxu0 0.0
        %853 = vmatpush1.msra.mxu0 0.0
        %854 = vmatprep.subr.mxu0 0.0
        %855 = vmatpush1.msra.mxu0 0.0
        %856 = vmatprep.subr.mxu0 0.0
        %857 = vmatpush1.msra.mxu0 0.0
        %858 = vmatprep.subr.mxu0 0.0
        %859 = vmatpush1.msra.mxu0 0.0
        %860 = vmatprep.subr.mxu0 0.0
        %861 = vmatpush1.msra.mxu0 0.0
        %862 = vmatprep.mubr.f32.mxu0 0.0
        %863 = vmatmul.mubr.f32.gmra.mrb[0].mxu0 %v796
        %v864 = vpop.f32.mrb[0].mxu0
        %v865 = vadd.f32 0.0, %v864
        %v866 = vpop.f32.mrb[0].mxu0
        %867 = vdwg.mxu0
        %v868 = vld [vmem:[%s2] sm:$0xff]
        %v869 = vld [vmem:[%s2 + $0x8] sm:$0xff]
        %v870 = vld [vmem:[%s2 + $0x10] sm:$0xff]
        %v871 = vld [vmem:[%s2 + $0x18] sm:$0xff]
        %v872 = vld [vmem:[%s2 + $0x20] sm:$0xff]
        %v873 = vld [vmem:[%s2 + $0x28] sm:$0xff]
        %v874 = vld [vmem:[%s2 + $0x30] sm:$0xff]
        %v875 = vld [vmem:[%s2 + $0x38] sm:$0xff]
        %v876 = vld [vmem:[%s2 + $0x40] sm:$0xff]
        %v877 = vld [vmem:[%s2 + $0x48] sm:$0xff]
        %v878 = vld [vmem:[%s2 + $0x50] sm:$0xff]
        %v879 = vld [vmem:[%s2 + $0x58] sm:$0xff]
        %v880 = vld [vmem:[%s2 + $0x60] sm:$0xff]
        %v881 = vld [vmem:[%s2 + $0x68] sm:$0xff]
        %v882 = vld [vmem:[%s2 + $0x70] sm:$0xff]
        %v883 = vld [vmem:[%s2 + $0x78] sm:$0xff]
        %v884 = vld [vmem:[%s2 + $0x80] sm:$0xff]
        %v885 = vld [vmem:[%s2 + $0x88] sm:$0xff]
        %v886 = vld [vmem:[%s2 + $0x90] sm:$0xff]
        %v887 = vld [vmem:[%s2 + $0x98] sm:$0xff]
        %v888 = vld [vmem:[%s2 + $0xa0] sm:$0xff]
        %v889 = vld [vmem:[%s2 + $0xa8] sm:$0xff]
        %v890 = vld [vmem:[%s2 + $0xb0] sm:$0xff]
        %v891 = vld [vmem:[%s2 + $0xb8] sm:$0xff]
        %v892 = vld [vmem:[%s2 + $0xc0] sm:$0xff]
        %v893 = vld [vmem:[%s2 + $0xc8] sm:$0xff]
        %v894 = vld [vmem:[%s2 + $0xd0] sm:$0xff]
        %v895 = vld [vmem:[%s2 + $0xd8] sm:$0xff]
        %v896 = vld [vmem:[%s2 + $0xe0] sm:$0xff]
        %v897 = vld [vmem:[%s2 + $0xe8] sm:$0xff]
        %v898 = vld [vmem:[%s2 + $0xf0] sm:$0xff]
        %v899 = vld [vmem:[%s2 + $0xf8] sm:$0xff]
        %v900 = vld [vmem:[%s2 + $0x100] sm:$0xff]
        %v901 = vld [vmem:[%s2 + $0x108] sm:$0xff]
        %v902 = vld [vmem:[%s2 + $0x110] sm:$0xff]
        %v903 = vld [vmem:[%s2 + $0x118] sm:$0xff]
        %v904 = vld [vmem:[%s2 + $0x120] sm:$0xff]
        %v905 = vld [vmem:[%s2 + $0x128] sm:$0xff]
        %v906 = vld [vmem:[%s2 + $0x130] sm:$0xff]
        %v907 = vld [vmem:[%s2 + $0x138] sm:$0xff]
        %v908 = vld [vmem:[%s2 + $0x140] sm:$0xff]
        %v909 = vld [vmem:[%s2 + $0x148] sm:$0xff]
        %v910 = vld [vmem:[%s2 + $0x150] sm:$0xff]
        %v911 = vld [vmem:[%s2 + $0x158] sm:$0xff]
        %v912 = vld [vmem:[%s2 + $0x160] sm:$0xff]
        %v913 = vld [vmem:[%s2 + $0x168] sm:$0xff]
        %v914 = vld [vmem:[%s2 + $0x170] sm:$0xff]
        %v915 = vld [vmem:[%s2 + $0x178] sm:$0xff]
        %v916 = vld [vmem:[%s9 + $0x1] ss:$0 sm:$0xff]
        %917 = vmatprep.subr.mxu0 0.0
        %918 = vmatpush1.msra.mxu0 %v868
        %919 = vmatprep.subr.mxu0 0.0
        %920 = vmatpush1.msra.mxu0 %v869
        %921 = vmatprep.subr.mxu0 0.0
        %922 = vmatpush1.msra.mxu0 %v870
        %923 = vmatprep.subr.mxu0 0.0
        %924 = vmatpush1.msra.mxu0 %v871
        %925 = vmatprep.subr.mxu0 0.0
        %926 = vmatpush1.msra.mxu0 %v872
        %927 = vmatprep.subr.mxu0 0.0
        %928 = vmatpush1.msra.mxu0 %v873
        %929 = vmatprep.subr.mxu0 0.0
        %930 = vmatpush1.msra.mxu0 %v874
        %931 = vmatprep.subr.mxu0 0.0
        %932 = vmatpush1.msra.mxu0 %v875
        %933 = vmatprep.subr.mxu0 0.0
        %934 = vmatpush1.msra.mxu0 %v876
        %935 = vmatprep.subr.mxu0 0.0
        %936 = vmatpush1.msra.mxu0 %v877
        %937 = vmatprep.subr.mxu0 0.0
        %938 = vmatpush1.msra.mxu0 %v878
        %939 = vmatprep.subr.mxu0 0.0
        %940 = vmatpush1.msra.mxu0 %v879
        %941 = vmatprep.subr.mxu0 0.0
        %942 = vmatpush1.msra.mxu0 %v880
        %943 = vmatprep.subr.mxu0 0.0
        %944 = vmatpush1.msra.mxu0 %v881
        %945 = vmatprep.subr.mxu0 0.0
        %946 = vmatpush1.msra.mxu0 %v882
        %947 = vmatprep.subr.mxu0 0.0
        %948 = vmatpush1.msra.mxu0 %v883
        %949 = vmatprep.subr.mxu0 0.0
        %950 = vmatpush1.msra.mxu0 %v884
        %951 = vmatprep.subr.mxu0 0.0
        %952 = vmatpush1.msra.mxu0 %v885
        %953 = vmatprep.subr.mxu0 0.0
        %954 = vmatpush1.msra.mxu0 %v886
        %955 = vmatprep.subr.mxu0 0.0
        %956 = vmatpush1.msra.mxu0 %v887
        %957 = vmatprep.subr.mxu0 0.0
        %958 = vmatpush1.msra.mxu0 %v888
        %959 = vmatprep.subr.mxu0 0.0
        %960 = vmatpush1.msra.mxu0 %v889
        %961 = vmatprep.subr.mxu0 0.0
        %962 = vmatpush1.msra.mxu0 %v890
        %963 = vmatprep.subr.mxu0 0.0
        %964 = vmatpush1.msra.mxu0 %v891
        %965 = vmatprep.subr.mxu0 0.0
        %966 = vmatpush1.msra.mxu0 %v892
        %967 = vmatprep.subr.mxu0 0.0
        %968 = vmatpush1.msra.mxu0 %v893
        %969 = vmatprep.subr.mxu0 0.0
        %970 = vmatpush1.msra.mxu0 %v894
        %971 = vmatprep.subr.mxu0 0.0
        %972 = vmatpush1.msra.mxu0 %v895
        %973 = vmatprep.subr.mxu0 0.0
        %974 = vmatpush1.msra.mxu0 %v896
        %975 = vmatprep.subr.mxu0 0.0
        %976 = vmatpush1.msra.mxu0 %v897
        %977 = vmatprep.subr.mxu0 0.0
        %978 = vmatpush1.msra.mxu0 %v898
        %979 = vmatprep.subr.mxu0 0.0
        %980 = vmatpush1.msra.mxu0 %v899
        %981 = vmatprep.mubr.f32.mxu0 %v790
        %982 = vmatmul.mubr.f32.gmra.mrb[0].mxu0 %v715
        %v983 = vpop.f32.mrb[0].mxu0
        %v984 = vadd.f32 %v916, %v983
        %v985 = vpop.f32.mrb[0].mxu0
        %986 = vdwg.mxu0
        %987 = vmatprep.subr.mxu0 0.0
        %988 = vmatpush1.msra.mxu0 %v900
        %989 = vmatprep.subr.mxu0 0.0
        %990 = vmatpush1.msra.mxu0 %v901
        %991 = vmatprep.subr.mxu0 0.0
        %992 = vmatpush1.msra.mxu0 %v902
        %993 = vmatprep.subr.mxu0 0.0
        %994 = vmatpush1.msra.mxu0 %v903
        %995 = vmatprep.subr.mxu0 0.0
        %996 = vmatpush1.msra.mxu0 %v904
        %997 = vmatprep.subr.mxu0 0.0
        %998 = vmatpush1.msra.mxu0 %v905
        %999 = vmatprep.subr.mxu0 0.0
        %1000 = vmatpush1.msra.mxu0 %v906
        %1001 = vmatprep.subr.mxu0 0.0
        %1002 = vmatpush1.msra.mxu0 %v907
        %1003 = vmatprep.subr.mxu0 0.0
        %1004 = vmatpush1.msra.mxu0 %v908
        %1005 = vmatprep.subr.mxu0 0.0
        %1006 = vmatpush1.msra.mxu0 %v909
        %1007 = vmatprep.subr.mxu0 0.0
        %1008 = vmatpush1.msra.mxu0 %v910
        %1009 = vmatprep.subr.mxu0 0.0
        %1010 = vmatpush1.msra.mxu0 %v911
        %1011 = vmatprep.subr.mxu0 0.0
        %1012 = vmatpush1.msra.mxu0 %v912
        %1013 = vmatprep.subr.mxu0 0.0
        %1014 = vmatpush1.msra.mxu0 %v913
        %1015 = vmatprep.subr.mxu0 0.0
        %1016 = vmatpush1.msra.mxu0 %v914
        %1017 = vmatprep.subr.mxu0 0.0
        %1018 = vmatpush1.msra.mxu0 %v915
        %1019 = vmatprep.subr.mxu0 0.0
        %1020 = vmatpush1.msra.mxu0 0.0
        %1021 = vmatprep.subr.mxu0 0.0
        %1022 = vmatpush1.msra.mxu0 0.0
        %1023 = vmatprep.subr.mxu0 0.0
        %1024 = vmatpush1.msra.mxu0 0.0
        %1025 = vmatprep.subr.mxu0 0.0
        %1026 = vmatpush1.msra.mxu0 0.0
        %1027 = vmatprep.subr.mxu0 0.0
        %1028 = vmatpush1.msra.mxu0 0.0
        %1029 = vmatprep.subr.mxu0 0.0
        %1030 = vmatpush1.msra.mxu0 0.0
        %1031 = vmatprep.subr.mxu0 0.0
        %1032 = vmatpush1.msra.mxu0 0.0
        %1033 = vmatprep.subr.mxu0 0.0
        %1034 = vmatpush1.msra.mxu0 0.0
        %1035 = vmatprep.subr.mxu0 0.0
        %1036 = vmatpush1.msra.mxu0 0.0
        %1037 = vmatprep.subr.mxu0 0.0
        %1038 = vmatpush1.msra.mxu0 0.0
        %1039 = vmatprep.subr.mxu0 0.0
        %1040 = vmatpush1.msra.mxu0 0.0
        %1041 = vmatprep.subr.mxu0 0.0
        %1042 = vmatpush1.msra.mxu0 0.0
        %1043 = vmatprep.subr.mxu0 0.0
        %1044 = vmatpush1.msra.mxu0 0.0
        %1045 = vmatprep.subr.mxu0 0.0
        %1046 = vmatpush1.msra.mxu0 0.0
        %1047 = vmatprep.subr.mxu0 0.0
        %1048 = vmatpush1.msra.mxu0 0.0
        %1049 = vmatprep.subr.mxu0 0.0
        %1050 = vmatpush1.msra.mxu0 0.0
        %1051 = vmatprep.mubr.f32.mxu0 0.0
        %1052 = vmatmul.mubr.f32.gmra.mrb[0].mxu0 %v865
        %v1053 = vpop.f32.mrb[0].mxu0
        %v1054 = vadd.f32 %v984, %v1053
        %v1055 = vpop.f32.mrb[0].mxu0
        %1056 = vdwg.mxu0
        %v1057 = vmax.f32 %v1054, 0.0
        %1058 = vst [vmem:[#allocation2 + $0x1] sm:$0xff] %v1057
        %1059 = vst [vmem:[#allocation2 + $0x9] sm:$0x1] 0.0
        %v1060 = vld [vmem:[#allocation2] sm:$0xff]
        %v1061 = vld [vmem:[#allocation2 + $0x1] sm:$0xff]
        %v1062 = vld [vmem:[#allocation2 + $0x2] sm:$0xff]
        %v1063 = vld [vmem:[#allocation8] sm:$0xff]
        %v1064 = vld [vmem:[#allocation8 + $0x8] sm:$0xff]
        %v1065 = vld [vmem:[#allocation8 + $0x10] sm:$0xff]
        %v1066 = vld [vmem:[#allocation8 + $0x18] sm:$0xff]
        %v1067 = vld [vmem:[#allocation8 + $0x20] sm:$0xff]
        %v1068 = vld [vmem:[#allocation8 + $0x28] sm:$0xff]
        %v1069 = vld [vmem:[#allocation8 + $0x30] sm:$0xff]
        %v1070 = vld [vmem:[#allocation8 + $0x38] sm:$0xff]
        %v1071 = vld [vmem:[#allocation8 + $0x40] sm:$0xff]
        %v1072 = vld [vmem:[#allocation8 + $0x48] sm:$0xff]
        %v1073 = vld [vmem:[#allocation8 + $0x50] sm:$0xff]
        %v1074 = vld [vmem:[#allocation8 + $0x58] sm:$0xff]
        %v1075 = vld [vmem:[#allocation8 + $0x60] sm:$0xff]
        %v1076 = vld [vmem:[#allocation8 + $0x68] sm:$0xff]
        %v1077 = vld [vmem:[#allocation8 + $0x70] sm:$0xff]
        %v1078 = vld [vmem:[#allocation8 + $0x78] sm:$0xff]
        %v1079 = vld [vmem:[#allocation8 + $0x80] sm:$0xff]
        %v1080 = vld [vmem:[#allocation8 + $0x88] sm:$0xff]
        %v1081 = vld [vmem:[#allocation8 + $0x90] sm:$0xff]
        %v1082 = vld [vmem:[#allocation8 + $0x98] sm:$0xff]
        %v1083 = vld [vmem:[#allocation8 + $0xa0] sm:$0xff]
        %v1084 = vld [vmem:[#allocation8 + $0xa8] sm:$0xff]
        %v1085 = vld [vmem:[#allocation8 + $0xb0] sm:$0xff]
        %v1086 = vld [vmem:[#allocation8 + $0xb8] sm:$0xff]
        %v1087 = vld [vmem:[#allocation8 + $0xc0] sm:$0xff]
        %v1088 = vld [vmem:[#allocation8 + $0xc8] sm:$0xff]
        %v1089 = vld [vmem:[#allocation8 + $0xd0] sm:$0xff]
        %v1090 = vld [vmem:[#allocation8 + $0xd8] sm:$0xff]
        %v1091 = vld [vmem:[#allocation8 + $0xe0] sm:$0xff]
        %v1092 = vld [vmem:[#allocation8 + $0xe8] sm:$0xff]
        %v1093 = vld [vmem:[#allocation8 + $0xf0] sm:$0xff]
        %v1094 = vld [vmem:[#allocation8 + $0xf8] sm:$0xff]
        %v1095 = vld [vmem:[#allocation8 + $0x100] sm:$0xff]
        %v1096 = vld [vmem:[#allocation8 + $0x108] sm:$0xff]
        %v1097 = vld [vmem:[#allocation8 + $0x110] sm:$0xff]
        %v1098 = vld [vmem:[#allocation8 + $0x118] sm:$0xff]
        %v1099 = vld [vmem:[#allocation8 + $0x120] sm:$0xff]
        %v1100 = vld [vmem:[#allocation8 + $0x128] sm:$0xff]
        %v1101 = vld [vmem:[#allocation8 + $0x130] sm:$0xff]
        %v1102 = vld [vmem:[#allocation8 + $0x138] sm:$0xff]
        %v1103 = vld [vmem:[#allocation8 + $0x140] sm:$0xff]
        %v1104 = vld [vmem:[#allocation8 + $0x148] sm:$0xff]
        %v1105 = vld [vmem:[#allocation8 + $0x150] sm:$0xff]
        %v1106 = vld [vmem:[#allocation8 + $0x158] sm:$0xff]
        %v1107 = vld [vmem:[#allocation8 + $0x160] sm:$0xff]
        %v1108 = vld [vmem:[#allocation8 + $0x168] sm:$0xff]
        %v1109 = vld [vmem:[#allocation8 + $0x170] sm:$0xff]
        %v1110 = vld [vmem:[#allocation8 + $0x178] sm:$0xff]
        %v1111 = vld [vmem:[#allocation8 + $0x180] sm:$0xff]
        %v1112 = vld [vmem:[#allocation8 + $0x188] sm:$0xff]
        %v1113 = vld [vmem:[#allocation8 + $0x190] sm:$0xff]
        %v1114 = vld [vmem:[#allocation8 + $0x198] sm:$0xff]
        %v1115 = vld [vmem:[#allocation8 + $0x1a0] sm:$0xff]
        %v1116 = vld [vmem:[#allocation8 + $0x1a8] sm:$0xff]
        %v1117 = vld [vmem:[#allocation8 + $0x1b0] sm:$0xff]
        %v1118 = vld [vmem:[#allocation8 + $0x1b8] sm:$0xff]
        %v1119 = vld [vmem:[#allocation8 + $0x1c0] sm:$0xff]
        %v1120 = vld [vmem:[#allocation8 + $0x1c8] sm:$0xff]
        %v1121 = vld [vmem:[#allocation8 + $0x1d0] sm:$0xff]
        %v1122 = vld [vmem:[#allocation8 + $0x1d8] sm:$0xff]
        %v1123 = vld [vmem:[#allocation8 + $0x1e0] sm:$0xff]
        %v1124 = vld [vmem:[#allocation8 + $0x1e8] sm:$0xff]
        %v1125 = vld [vmem:[#allocation8 + $0x1f0] sm:$0xff]
        %v1126 = vld [vmem:[#allocation8 + $0x1f8] sm:$0xff]
        %v1127 = vld [vmem:[#allocation8 + $0x200] sm:$0xff]
        %v1128 = vld [vmem:[#allocation8 + $0x208] sm:$0xff]
        %v1129 = vld [vmem:[#allocation8 + $0x210] sm:$0xff]
        %v1130 = vld [vmem:[#allocation8 + $0x218] sm:$0xff]
        %v1131 = vld [vmem:[#allocation8 + $0x220] sm:$0xff]
        %v1132 = vld [vmem:[#allocation8 + $0x228] sm:$0xff]
        %v1133 = vld [vmem:[#allocation8 + $0x230] sm:$0xff]
        %v1134 = vld [vmem:[#allocation8 + $0x238] sm:$0xff]
        %v1135 = vld [vmem:[#allocation8 + $0x240] sm:$0xff]
        %v1136 = vld [vmem:[#allocation8 + $0x248] sm:$0xff]
        %v1137 = vld [vmem:[#allocation8 + $0x250] sm:$0xff]
        %v1138 = vld [vmem:[#allocation8 + $0x258] sm:$0xff]
        %v1139 = vld [vmem:[#allocation8 + $0x260] sm:$0xff]
        %v1140 = vld [vmem:[#allocation8 + $0x268] sm:$0xff]
        %v1141 = vld [vmem:[#allocation8 + $0x270] sm:$0xff]
        %v1142 = vld [vmem:[#allocation8 + $0x278] sm:$0xff]
        %v1143 = vld [vmem:[#allocation8 + $0x280] sm:$0xff]
        %v1144 = vld [vmem:[#allocation8 + $0x288] sm:$0xff]
        %v1145 = vld [vmem:[#allocation8 + $0x290] sm:$0xff]
        %v1146 = vld [vmem:[#allocation8 + $0x298] sm:$0xff]
        %v1147 = vld [vmem:[#allocation8 + $0x2a0] sm:$0xff]
        %v1148 = vld [vmem:[#allocation8 + $0x2a8] sm:$0xff]
        %v1149 = vld [vmem:[#allocation8 + $0x2b0] sm:$0xff]
        %v1150 = vld [vmem:[#allocation8 + $0x2b8] sm:$0xff]
        %v1151 = vld [vmem:[#allocation8 + $0x2c0] sm:$0xff]
        %v1152 = vld [vmem:[#allocation8 + $0x2c8] sm:$0xff]
        %v1153 = vld [vmem:[#allocation8 + $0x2d0] sm:$0xff]
        %v1154 = vld [vmem:[#allocation8 + $0x2d8] sm:$0xff]
        %v1155 = vld [vmem:[#allocation8 + $0x2e0] sm:$0xff]
        %v1156 = vld [vmem:[#allocation8 + $0x2e8] sm:$0xff]
        %v1157 = vld [vmem:[#allocation8 + $0x2f0] sm:$0xff]
        %v1158 = vld [vmem:[#allocation8 + $0x2f8] sm:$0xff]
        %s1159 = scalar_lea.vmem %s9, 2
        %v1160 = vld [vmem:[%s1159] ss:$8 sm:$0x3]
        %v1162 = vlaneseq
        %v1163 = vshrl.u32 %v1162, 7
        %v1164 = vsub.s32 0, %v1163
        %v1165 = vrot.slane %v1160, %v1164
        %v1166 = vlaneseq
        %v1167 = vshrl.u32 %v1166, 7
        %v1168 = vsub.s32 1, %v1167
        %v1169 = vrot.slane %v1160, %v1168
        %1172 = vmatprep.subr.mxu0 %v1064
        %1173 = vmatpush1.msra.mxu0 %v1063
        %1174 = vmatprep.subr.mxu0 %v1066
        %1175 = vmatpush1.msra.mxu0 %v1065
        %1176 = vmatprep.subr.mxu0 %v1068
        %1177 = vmatpush1.msra.mxu0 %v1067
        %1178 = vmatprep.subr.mxu0 %v1070
        %1179 = vmatpush1.msra.mxu0 %v1069
        %1180 = vmatprep.subr.mxu0 %v1072
        %1181 = vmatpush1.msra.mxu0 %v1071
        %1182 = vmatprep.subr.mxu0 %v1074
        %1183 = vmatpush1.msra.mxu0 %v1073
        %1184 = vmatprep.subr.mxu0 %v1076
        %1185 = vmatpush1.msra.mxu0 %v1075
        %1186 = vmatprep.subr.mxu0 %v1078
        %1187 = vmatpush1.msra.mxu0 %v1077
        %1188 = vmatprep.subr.mxu0 %v1080
        %1189 = vmatpush1.msra.mxu0 %v1079
        %1190 = vmatprep.subr.mxu0 %v1082
        %1191 = vmatpush1.msra.mxu0 %v1081
        %1192 = vmatprep.subr.mxu0 %v1084
        %1193 = vmatpush1.msra.mxu0 %v1083
        %1194 = vmatprep.subr.mxu0 %v1086
        %1195 = vmatpush1.msra.mxu0 %v1085
        %1196 = vmatprep.subr.mxu0 %v1088
        %1197 = vmatpush1.msra.mxu0 %v1087
        %1198 = vmatprep.subr.mxu0 %v1090
        %1199 = vmatpush1.msra.mxu0 %v1089
        %1200 = vmatprep.subr.mxu0 %v1092
        %1201 = vmatpush1.msra.mxu0 %v1091
        %1202 = vmatprep.subr.mxu0 %v1094
        %1203 = vmatpush1.msra.mxu0 %v1093
        %1204 = vmatprep.subr.mxu0 %v1096
        %1205 = vmatpush1.msra.mxu0 %v1095
        %1206 = vmatprep.subr.mxu0 %v1098
        %1207 = vmatpush1.msra.mxu0 %v1097
        %1208 = vmatprep.subr.mxu0 %v1100
        %1209 = vmatpush1.msra.mxu0 %v1099
        %1210 = vmatprep.subr.mxu0 %v1102
        %1211 = vmatpush1.msra.mxu0 %v1101
        %1212 = vmatprep.subr.mxu0 %v1104
        %1213 = vmatpush1.msra.mxu0 %v1103
        %1214 = vmatprep.subr.mxu0 %v1106
        %1215 = vmatpush1.msra.mxu0 %v1105
        %1216 = vmatprep.subr.mxu0 %v1108
        %1217 = vmatpush1.msra.mxu0 %v1107
        %1218 = vmatprep.subr.mxu0 %v1110
        %1219 = vmatpush1.msra.mxu0 %v1109
        %1220 = vmatprep.subr.mxu0 %v1112
        %1221 = vmatpush1.msra.mxu0 %v1111
        %1222 = vmatprep.subr.mxu0 %v1114
        %1223 = vmatpush1.msra.mxu0 %v1113
        %1224 = vmatprep.subr.mxu0 %v1116
        %1225 = vmatpush1.msra.mxu0 %v1115
        %1226 = vmatprep.subr.mxu0 %v1118
        %1227 = vmatpush1.msra.mxu0 %v1117
        %1228 = vmatprep.subr.mxu0 %v1120
        %1229 = vmatpush1.msra.mxu0 %v1119
        %1230 = vmatprep.subr.mxu0 %v1122
        %1231 = vmatpush1.msra.mxu0 %v1121
        %1232 = vmatprep.subr.mxu0 %v1124
        %1233 = vmatpush1.msra.mxu0 %v1123
        %1234 = vmatprep.subr.mxu0 %v1126
        %1235 = vmatpush1.msra.mxu0 %v1125
        %1236 = vmatprep.mubr.f32.mxu0 %v1061
        %1237 = vmatmul.mubr.f32.gmra.mrb[0].mxu0 %v1060
        %v1238 = vpop.f32.mrb[0].mxu0
        %v1239 = vadd.f32 %v1165, %v1238
        %v1240 = vpop.f32.mrb[0].mxu0
        %v1241 = vadd.f32 %v1169, %v1240
        %1242 = vdwg.mxu0
        %1243 = vmatprep.subr.mxu0 %v1128
        %1244 = vmatpush1.msra.mxu0 %v1127
        %1245 = vmatprep.subr.mxu0 %v1130
        %1246 = vmatpush1.msra.mxu0 %v1129
        %1247 = vmatprep.subr.mxu0 %v1132
        %1248 = vmatpush1.msra.mxu0 %v1131
        %1249 = vmatprep.subr.mxu0 %v1134
        %1250 = vmatpush1.msra.mxu0 %v1133
        %1251 = vmatprep.subr.mxu0 %v1136
        %1252 = vmatpush1.msra.mxu0 %v1135
        %1253 = vmatprep.subr.mxu0 %v1138
        %1254 = vmatpush1.msra.mxu0 %v1137
        %1255 = vmatprep.subr.mxu0 %v1140
        %1256 = vmatpush1.msra.mxu0 %v1139
        %1257 = vmatprep.subr.mxu0 %v1142
        %1258 = vmatpush1.msra.mxu0 %v1141
        %1259 = vmatprep.subr.mxu0 %v1144
        %1260 = vmatpush1.msra.mxu0 %v1143
        %1261 = vmatprep.subr.mxu0 %v1146
        %1262 = vmatpush1.msra.mxu0 %v1145
        %1263 = vmatprep.subr.mxu0 %v1148
        %1264 = vmatpush1.msra.mxu0 %v1147
        %1265 = vmatprep.subr.mxu0 %v1150
        %1266 = vmatpush1.msra.mxu0 %v1149
        %1267 = vmatprep.subr.mxu0 %v1152
        %1268 = vmatpush1.msra.mxu0 %v1151
        %1269 = vmatprep.subr.mxu0 %v1154
        %1270 = vmatpush1.msra.mxu0 %v1153
        %1271 = vmatprep.subr.mxu0 %v1156
        %1272 = vmatpush1.msra.mxu0 %v1155
        %1273 = vmatprep.subr.mxu0 %v1158
        %1274 = vmatpush1.msra.mxu0 %v1157
        %1275 = vmatprep.subr.mxu0 0.0
        %1276 = vmatpush1.msra.mxu0 0.0
        %1277 = vmatprep.subr.mxu0 0.0
        %1278 = vmatpush1.msra.mxu0 0.0
        %1279 = vmatprep.subr.mxu0 0.0
        %1280 = vmatpush1.msra.mxu0 0.0
        %1281 = vmatprep.subr.mxu0 0.0
        %1282 = vmatpush1.msra.mxu0 0.0
        %1283 = vmatprep.subr.mxu0 0.0
        %1284 = vmatpush1.msra.mxu0 0.0
        %1285 = vmatprep.subr.mxu0 0.0
        %1286 = vmatpush1.msra.mxu0 0.0
        %1287 = vmatprep.subr.mxu0 0.0
        %1288 = vmatpush1.msra.mxu0 0.0
        %1289 = vmatprep.subr.mxu0 0.0
        %1290 = vmatpush1.msra.mxu0 0.0
        %1291 = vmatprep.subr.mxu0 0.0
        %1292 = vmatpush1.msra.mxu0 0.0
        %1293 = vmatprep.subr.mxu0 0.0
        %1294 = vmatpush1.msra.mxu0 0.0
        %1295 = vmatprep.subr.mxu0 0.0
        %1296 = vmatpush1.msra.mxu0 0.0
        %1297 = vmatprep.subr.mxu0 0.0
        %1298 = vmatpush1.msra.mxu0 0.0
        %1299 = vmatprep.subr.mxu0 0.0
        %1300 = vmatpush1.msra.mxu0 0.0
        %1301 = vmatprep.subr.mxu0 0.0
        %1302 = vmatpush1.msra.mxu0 0.0
        %1303 = vmatprep.subr.mxu0 0.0
        %1304 = vmatpush1.msra.mxu0 0.0
        %1305 = vmatprep.subr.mxu0 0.0
        %1306 = vmatpush1.msra.mxu0 0.0
        %1307 = vmatprep.mubr.f32.mxu0 0.0
        %1308 = vmatmul.mubr.f32.gmra.mrb[0].mxu0 %v1062
        %v1309 = vpop.f32.mrb[0].mxu0
        %v1310 = vadd.f32 %v1239, %v1309
        %v1311 = vpop.f32.mrb[0].mxu0
        %v1312 = vadd.f32 %v1241, %v1311
        %1313 = vdwg.mxu0
        %1314 = vst [vmem:[%s493] sm:$0xff] %v1312
        %v1315 = vmax.f32 %v1310, 0.0
        %1316 = vst [vmem:[#allocation2 + $0x1] sm:$0xff] %v1315
        %1317 = vst [vmem:[#allocation2 + $0x9] sm:$0x1] 0.0
        %v1318 = vld [vmem:[#allocation2] sm:$0xff]
        %v1319 = vld [vmem:[#allocation2 + $0x1] sm:$0xff]
        %v1320 = vld [vmem:[#allocation2 + $0x2] sm:$0xff]
        %v1321 = vld [vmem:[#allocation9] sm:$0xff]
        %v1322 = vld [vmem:[#allocation9 + $0x8] sm:$0xff]
        %v1323 = vld [vmem:[#allocation9 + $0x10] sm:$0xff]
        %v1324 = vld [vmem:[#allocation9 + $0x18] sm:$0xff]
        %v1325 = vld [vmem:[#allocation9 + $0x20] sm:$0xff]
        %v1326 = vld [vmem:[#allocation9 + $0x28] sm:$0xff]
        %v1327 = vld [vmem:[#allocation9 + $0x30] sm:$0xff]
        %v1328 = vld [vmem:[#allocation9 + $0x38] sm:$0xff]
        %v1329 = vld [vmem:[#allocation9 + $0x40] sm:$0xff]
        %v1330 = vld [vmem:[#allocation9 + $0x48] sm:$0xff]
        %v1331 = vld [vmem:[#allocation9 + $0x50] sm:$0xff]
        %v1332 = vld [vmem:[#allocation9 + $0x58] sm:$0xff]
        %v1333 = vld [vmem:[#allocation9 + $0x60] sm:$0xff]
        %v1334 = vld [vmem:[#allocation9 + $0x68] sm:$0xff]
        %v1335 = vld [vmem:[#allocation9 + $0x70] sm:$0xff]
        %v1336 = vld [vmem:[#allocation9 + $0x78] sm:$0xff]
        %v1337 = vld [vmem:[#allocation9 + $0x80] sm:$0xff]
        %v1338 = vld [vmem:[#allocation9 + $0x88] sm:$0xff]
        %v1339 = vld [vmem:[#allocation9 + $0x90] sm:$0xff]
        %v1340 = vld [vmem:[#allocation9 + $0x98] sm:$0xff]
        %v1341 = vld [vmem:[#allocation9 + $0xa0] sm:$0xff]
        %v1342 = vld [vmem:[#allocation9 + $0xa8] sm:$0xff]
        %v1343 = vld [vmem:[#allocation9 + $0xb0] sm:$0xff]
        %v1344 = vld [vmem:[#allocation9 + $0xb8] sm:$0xff]
        %v1345 = vld [vmem:[#allocation9 + $0xc0] sm:$0xff]
        %v1346 = vld [vmem:[#allocation9 + $0xc8] sm:$0xff]
        %v1347 = vld [vmem:[#allocation9 + $0xd0] sm:$0xff]
        %v1348 = vld [vmem:[#allocation9 + $0xd8] sm:$0xff]
        %v1349 = vld [vmem:[#allocation9 + $0xe0] sm:$0xff]
        %v1350 = vld [vmem:[#allocation9 + $0xe8] sm:$0xff]
        %v1351 = vld [vmem:[#allocation9 + $0xf0] sm:$0xff]
        %v1352 = vld [vmem:[#allocation9 + $0xf8] sm:$0xff]
        %v1353 = vld [vmem:[#allocation9 + $0x100] sm:$0xff]
        %v1354 = vld [vmem:[#allocation9 + $0x108] sm:$0xff]
        %v1355 = vld [vmem:[#allocation9 + $0x110] sm:$0xff]
        %v1356 = vld [vmem:[#allocation9 + $0x118] sm:$0xff]
        %v1357 = vld [vmem:[#allocation9 + $0x120] sm:$0xff]
        %v1358 = vld [vmem:[#allocation9 + $0x128] sm:$0xff]
        %v1359 = vld [vmem:[#allocation9 + $0x130] sm:$0xff]
        %v1360 = vld [vmem:[#allocation9 + $0x138] sm:$0xff]
        %v1361 = vld [vmem:[#allocation9 + $0x140] sm:$0xff]
        %v1362 = vld [vmem:[#allocation9 + $0x148] sm:$0xff]
        %v1363 = vld [vmem:[#allocation9 + $0x150] sm:$0xff]
        %v1364 = vld [vmem:[#allocation9 + $0x158] sm:$0xff]
        %v1365 = vld [vmem:[#allocation9 + $0x160] sm:$0xff]
        %v1366 = vld [vmem:[#allocation9 + $0x168] sm:$0xff]
        %v1367 = vld [vmem:[#allocation9 + $0x170] sm:$0xff]
        %v1368 = vld [vmem:[#allocation9 + $0x178] sm:$0xff]
        %v1369 = vld [vmem:[%s9 + $0x3] ss:$0 sm:$0xff]
        %1370 = vmatprep.subr.mxu0 0.0
        %1371 = vmatpush1.msra.mxu0 %v1321
        %1372 = vmatprep.subr.mxu0 0.0
        %1373 = vmatpush1.msra.mxu0 %v1322
        %1374 = vmatprep.subr.mxu0 0.0
        %1375 = vmatpush1.msra.mxu0 %v1323
        %1376 = vmatprep.subr.mxu0 0.0
        %1377 = vmatpush1.msra.mxu0 %v1324
        %1378 = vmatprep.subr.mxu0 0.0
        %1379 = vmatpush1.msra.mxu0 %v1325
        %1380 = vmatprep.subr.mxu0 0.0
        %1381 = vmatpush1.msra.mxu0 %v1326
        %1382 = vmatprep.subr.mxu0 0.0
        %1383 = vmatpush1.msra.mxu0 %v1327
        %1384 = vmatprep.subr.mxu0 0.0
        %1385 = vmatpush1.msra.mxu0 %v1328
        %1386 = vmatprep.subr.mxu0 0.0
        %1387 = vmatpush1.msra.mxu0 %v1329
        %1388 = vmatprep.subr.mxu0 0.0
        %1389 = vmatpush1.msra.mxu0 %v1330
        %1390 = vmatprep.subr.mxu0 0.0
        %1391 = vmatpush1.msra.mxu0 %v1331
        %1392 = vmatprep.subr.mxu0 0.0
        %1393 = vmatpush1.msra.mxu0 %v1332
        %1394 = vmatprep.subr.mxu0 0.0
        %1395 = vmatpush1.msra.mxu0 %v1333
        %1396 = vmatprep.subr.mxu0 0.0
        %1397 = vmatpush1.msra.mxu0 %v1334
        %1398 = vmatprep.subr.mxu0 0.0
        %1399 = vmatpush1.msra.mxu0 %v1335
        %1400 = vmatprep.subr.mxu0 0.0
        %1401 = vmatpush1.msra.mxu0 %v1336
        %1402 = vmatprep.subr.mxu0 0.0
        %1403 = vmatpush1.msra.mxu0 %v1337
        %1404 = vmatprep.subr.mxu0 0.0
        %1405 = vmatpush1.msra.mxu0 %v1338
        %1406 = vmatprep.subr.mxu0 0.0
        %1407 = vmatpush1.msra.mxu0 %v1339
        %1408 = vmatprep.subr.mxu0 0.0
        %1409 = vmatpush1.msra.mxu0 %v1340
        %1410 = vmatprep.subr.mxu0 0.0
        %1411 = vmatpush1.msra.mxu0 %v1341
        %1412 = vmatprep.subr.mxu0 0.0
        %1413 = vmatpush1.msra.mxu0 %v1342
        %1414 = vmatprep.subr.mxu0 0.0
        %1415 = vmatpush1.msra.mxu0 %v1343
        %1416 = vmatprep.subr.mxu0 0.0
        %1417 = vmatpush1.msra.mxu0 %v1344
        %1418 = vmatprep.subr.mxu0 0.0
        %1419 = vmatpush1.msra.mxu0 %v1345
        %1420 = vmatprep.subr.mxu0 0.0
        %1421 = vmatpush1.msra.mxu0 %v1346
        %1422 = vmatprep.subr.mxu0 0.0
        %1423 = vmatpush1.msra.mxu0 %v1347
        %1424 = vmatprep.subr.mxu0 0.0
        %1425 = vmatpush1.msra.mxu0 %v1348
        %1426 = vmatprep.subr.mxu0 0.0
        %1427 = vmatpush1.msra.mxu0 %v1349
        %1428 = vmatprep.subr.mxu0 0.0
        %1429 = vmatpush1.msra.mxu0 %v1350
        %1430 = vmatprep.subr.mxu0 0.0
        %1431 = vmatpush1.msra.mxu0 %v1351
        %1432 = vmatprep.subr.mxu0 0.0
        %1433 = vmatpush1.msra.mxu0 %v1352
        %1434 = vmatprep.mubr.f32.mxu0 %v1319
        %1435 = vmatmul.mubr.f32.gmra.mrb[0].mxu0 %v1318
        %v1436 = vpop.f32.mrb[0].mxu0
        %v1437 = vadd.f32 %v1369, %v1436
        %v1438 = vpop.f32.mrb[0].mxu0
        %1439 = vdwg.mxu0
        %1440 = vmatprep.subr.mxu0 0.0
        %1441 = vmatpush1.msra.mxu0 %v1353
        %1442 = vmatprep.subr.mxu0 0.0
        %1443 = vmatpush1.msra.mxu0 %v1354
        %1444 = vmatprep.subr.mxu0 0.0
        %1445 = vmatpush1.msra.mxu0 %v1355
        %1446 = vmatprep.subr.mxu0 0.0
        %1447 = vmatpush1.msra.mxu0 %v1356
        %1448 = vmatprep.subr.mxu0 0.0
        %1449 = vmatpush1.msra.mxu0 %v1357
        %1450 = vmatprep.subr.mxu0 0.0
        %1451 = vmatpush1.msra.mxu0 %v1358
        %1452 = vmatprep.subr.mxu0 0.0
        %1453 = vmatpush1.msra.mxu0 %v1359
        %1454 = vmatprep.subr.mxu0 0.0
        %1455 = vmatpush1.msra.mxu0 %v1360
        %1456 = vmatprep.subr.mxu0 0.0
        %1457 = vmatpush1.msra.mxu0 %v1361
        %1458 = vmatprep.subr.mxu0 0.0
        %1459 = vmatpush1.msra.mxu0 %v1362
        %1460 = vmatprep.subr.mxu0 0.0
        %1461 = vmatpush1.msra.mxu0 %v1363
        %1462 = vmatprep.subr.mxu0 0.0
        %1463 = vmatpush1.msra.mxu0 %v1364
        %1464 = vmatprep.subr.mxu0 0.0
        %1465 = vmatpush1.msra.mxu0 %v1365
        %1466 = vmatprep.subr.mxu0 0.0
        %1467 = vmatpush1.msra.mxu0 %v1366
        %1468 = vmatprep.subr.mxu0 0.0
        %1469 = vmatpush1.msra.mxu0 %v1367
        %1470 = vmatprep.subr.mxu0 0.0
        %1471 = vmatpush1.msra.mxu0 %v1368
        %1472 = vmatprep.subr.mxu0 0.0
        %1473 = vmatpush1.msra.mxu0 0.0
        %1474 = vmatprep.subr.mxu0 0.0
        %1475 = vmatpush1.msra.mxu0 0.0
        %1476 = vmatprep.subr.mxu0 0.0
        %1477 = vmatpush1.msra.mxu0 0.0
        %1478 = vmatprep.subr.mxu0 0.0
        %1479 = vmatpush1.msra.mxu0 0.0
        %1480 = vmatprep.subr.mxu0 0.0
        %1481 = vmatpush1.msra.mxu0 0.0
        %1482 = vmatprep.subr.mxu0 0.0
        %1483 = vmatpush1.msra.mxu0 0.0
        %1484 = vmatprep.subr.mxu0 0.0
        %1485 = vmatpush1.msra.mxu0 0.0
        %1486 = vmatprep.subr.mxu0 0.0
        %1487 = vmatpush1.msra.mxu0 0.0
        %1488 = vmatprep.subr.mxu0 0.0
        %1489 = vmatpush1.msra.mxu0 0.0
        %1490 = vmatprep.subr.mxu0 0.0
        %1491 = vmatpush1.msra.mxu0 0.0
        %1492 = vmatprep.subr.mxu0 0.0
        %1493 = vmatpush1.msra.mxu0 0.0
        %1494 = vmatprep.subr.mxu0 0.0
        %1495 = vmatpush1.msra.mxu0 0.0
        %1496 = vmatprep.subr.mxu0 0.0
        %1497 = vmatpush1.msra.mxu0 0.0
        %1498 = vmatprep.subr.mxu0 0.0
        %1499 = vmatpush1.msra.mxu0 0.0
        %1500 = vmatprep.subr.mxu0 0.0
        %1501 = vmatpush1.msra.mxu0 0.0
        %1502 = vmatprep.subr.mxu0 0.0
        %1503 = vmatpush1.msra.mxu0 0.0
        %1504 = vmatprep.mubr.f32.mxu0 0.0
        %1505 = vmatmul.mubr.f32.gmra.mrb[0].mxu0 %v1320
        %v1506 = vpop.f32.mrb[0].mxu0
        %v1507 = vadd.f32 %v1437, %v1506
        %v1508 = vpop.f32.mrb[0].mxu0
        %1509 = vdwg.mxu0
        %1510 = vst [vmem:[%s500] sm:$0xff] %v1507
        %v1511 = vld [vmem:[%s8] sm:$0xf]
        %vm1512 = vcmask 64512
        %v1514 = vsel %vm1512, %v1511, 0
        %1516 = vmatprep.subr.mxu0 0.0
        %1517 = vmatpush1.msra.mxu0 %v1315
        %1518 = vmatprep.subr.mxu0 0.0
        %1519 = vmatpush1.msra.mxu0 0.0
        %1520 = vmatprep.subr.mxu0 0.0
        %1521 = vmatpush1.msra.mxu0 0.0
        %1522 = vmatprep.subr.mxu0 0.0
        %1523 = vmatpush1.msra.mxu0 0.0
        %1524 = vmatprep.subr.mxu0 0.0
        %1525 = vmatpush1.msra.mxu0 0.0
        %1526 = vmatprep.subr.mxu0 0.0
        %1527 = vmatpush1.msra.mxu0 0.0
        %1528 = vmatprep.subr.mxu0 0.0
        %1529 = vmatpush1.msra.mxu0 0.0
        %1530 = vmatprep.subr.mxu0 0.0
        %1531 = vmatpush1.msra.mxu0 0.0
        %1532 = vmatprep.subr.mxu0 0.0
        %1533 = vmatpush1.msra.mxu0 0.0
        %1534 = vmatprep.subr.mxu0 0.0
        %1535 = vmatpush1.msra.mxu0 0.0
        %1536 = vmatprep.subr.mxu0 0.0
        %1537 = vmatpush1.msra.mxu0 0.0
        %1538 = vmatprep.subr.mxu0 0.0
        %1539 = vmatpush1.msra.mxu0 0.0
        %1540 = vmatprep.subr.mxu0 0.0
        %1541 = vmatpush1.msra.mxu0 0.0
        %1542 = vmatprep.subr.mxu0 0.0
        %1543 = vmatpush1.msra.mxu0 0.0
        %1544 = vmatprep.subr.mxu0 0.0
        %1545 = vmatpush1.msra.mxu0 0.0
        %1546 = vmatprep.subr.mxu0 0.0
        %1547 = vmatpush1.msra.mxu0 0.0
        %1548 = vmatprep.subr.mxu0 0.0
        %1549 = vmatpush1.msra.mxu0 0.0
        %1550 = vmatprep.subr.mxu0 0.0
        %1551 = vmatpush1.msra.mxu0 0.0
        %1552 = vmatprep.subr.mxu0 0.0
        %1553 = vmatpush1.msra.mxu0 0.0
        %1554 = vmatprep.subr.mxu0 0.0
        %1555 = vmatpush1.msra.mxu0 0.0
        %1556 = vmatprep.subr.mxu0 0.0
        %1557 = vmatpush1.msra.mxu0 0.0
        %1558 = vmatprep.subr.mxu0 0.0
        %1559 = vmatpush1.msra.mxu0 0.0
        %1560 = vmatprep.subr.mxu0 0.0
        %1561 = vmatpush1.msra.mxu0 0.0
        %1562 = vmatprep.subr.mxu0 0.0
        %1563 = vmatpush1.msra.mxu0 0.0
        %1564 = vmatprep.subr.mxu0 0.0
        %1565 = vmatpush1.msra.mxu0 0.0
        %1566 = vmatprep.subr.mxu0 0.0
        %1567 = vmatpush1.msra.mxu0 0.0
        %1568 = vmatprep.subr.mxu0 0.0
        %1569 = vmatpush1.msra.mxu0 0.0
        %1570 = vmatprep.subr.mxu0 0.0
        %1571 = vmatpush1.msra.mxu0 0.0
        %1572 = vmatprep.subr.mxu0 0.0
        %1573 = vmatpush1.msra.mxu0 0.0
        %1574 = vmatprep.subr.mxu0 0.0
        %1575 = vmatpush1.msra.mxu0 0.0
        %1576 = vmatprep.subr.mxu0 0.0
        %1577 = vmatpush1.msra.mxu0 0.0
        %1578 = vmatprep.subr.mxu0 0.0
        %1579 = vmatpush1.msra.mxu0 0.0
        %1580 = vmatprep.mubr.f32.mxu0 0.0
        %1581 = vmatmul.mubr.f32.gmra.mrb[0].mxu0 %v1514
        %v1582 = vpop.f32.mrb[0].mxu0
        %v1583 = vadd.f32 0.0, %v1582
        %v1584 = vpop.f32.mrb[0].mxu0
        %1585 = vdwg.mxu0
        %s1586 = scalar_lea.vmem %s8, 4
        %v1587 = vld [vmem:[%s1586] sm:$0xf]
        %v1589 = vsel %vm1512, %v1587, 0
        %1591 = vmatprep.subr.mxu0 0.0
        %1592 = vmatpush1.msra.mxu0 %v1315
        %1593 = vmatprep.subr.mxu0 0.0
        %1594 = vmatpush1.msra.mxu0 0.0
        %1595 = vmatprep.subr.mxu0 0.0
        %1596 = vmatpush1.msra.mxu0 0.0
        %1597 = vmatprep.subr.mxu0 0.0
        %1598 = vmatpush1.msra.mxu0 0.0
        %1599 = vmatprep.subr.mxu0 0.0
        %1600 = vmatpush1.msra.mxu0 0.0
        %1601 = vmatprep.subr.mxu0 0.0
        %1602 = vmatpush1.msra.mxu0 0.0
        %1603 = vmatprep.subr.mxu0 0.0
        %1604 = vmatpush1.msra.mxu0 0.0
        %1605 = vmatprep.subr.mxu0 0.0
        %1606 = vmatpush1.msra.mxu0 0.0
        %1607 = vmatprep.subr.mxu0 0.0
        %1608 = vmatpush1.msra.mxu0 0.0
        %1609 = vmatprep.subr.mxu0 0.0
        %1610 = vmatpush1.msra.mxu0 0.0
        %1611 = vmatprep.subr.mxu0 0.0
        %1612 = vmatpush1.msra.mxu0 0.0
        %1613 = vmatprep.subr.mxu0 0.0
        %1614 = vmatpush1.msra.mxu0 0.0
        %1615 = vmatprep.subr.mxu0 0.0
        %1616 = vmatpush1.msra.mxu0 0.0
        %1617 = vmatprep.subr.mxu0 0.0
        %1618 = vmatpush1.msra.mxu0 0.0
        %1619 = vmatprep.subr.mxu0 0.0
        %1620 = vmatpush1.msra.mxu0 0.0
        %1621 = vmatprep.subr.mxu0 0.0
        %1622 = vmatpush1.msra.mxu0 0.0
        %1623 = vmatprep.subr.mxu0 0.0
        %1624 = vmatpush1.msra.mxu0 0.0
        %1625 = vmatprep.subr.mxu0 0.0
        %1626 = vmatpush1.msra.mxu0 0.0
        %1627 = vmatprep.subr.mxu0 0.0
        %1628 = vmatpush1.msra.mxu0 0.0
        %1629 = vmatprep.subr.mxu0 0.0
        %1630 = vmatpush1.msra.mxu0 0.0
        %1631 = vmatprep.subr.mxu0 0.0
        %1632 = vmatpush1.msra.mxu0 0.0
        %1633 = vmatprep.subr.mxu0 0.0
        %1634 = vmatpush1.msra.mxu0 0.0
        %1635 = vmatprep.subr.mxu0 0.0
        %1636 = vmatpush1.msra.mxu0 0.0
        %1637 = vmatprep.subr.mxu0 0.0
        %1638 = vmatpush1.msra.mxu0 0.0
        %1639 = vmatprep.subr.mxu0 0.0
        %1640 = vmatpush1.msra.mxu0 0.0
        %1641 = vmatprep.subr.mxu0 0.0
        %1642 = vmatpush1.msra.mxu0 0.0
        %1643 = vmatprep.subr.mxu0 0.0
        %1644 = vmatpush1.msra.mxu0 0.0
        %1645 = vmatprep.subr.mxu0 0.0
        %1646 = vmatpush1.msra.mxu0 0.0
        %1647 = vmatprep.subr.mxu0 0.0
        %1648 = vmatpush1.msra.mxu0 0.0
        %1649 = vmatprep.subr.mxu0 0.0
        %1650 = vmatpush1.msra.mxu0 0.0
        %1651 = vmatprep.subr.mxu0 0.0
        %1652 = vmatpush1.msra.mxu0 0.0
        %1653 = vmatprep.subr.mxu0 0.0
        %1654 = vmatpush1.msra.mxu0 0.0
        %1655 = vmatprep.mubr.f32.mxu0 0.0
        %1656 = vmatmul.mubr.f32.gmra.mrb[0].mxu0 %v1589
        %v1657 = vpop.f32.mrb[0].mxu0
        %v1658 = vadd.f32 0.0, %v1657
        %v1659 = vpop.f32.mrb[0].mxu0
        %1660 = vdwg.mxu0
        %s1661 = scalar_lea.vmem %s8, 8
        %v1662 = vld [vmem:[%s1661] sm:$0xf]
        %v1664 = vsel %vm1512, %v1662, 0
        %1666 = vmatprep.subr.mxu0 0.0
        %1667 = vmatpush1.msra.mxu0 %v1315
        %1668 = vmatprep.subr.mxu0 0.0
        %1669 = vmatpush1.msra.mxu0 0.0
        %1670 = vmatprep.subr.mxu0 0.0
        %1671 = vmatpush1.msra.mxu0 0.0
        %1672 = vmatprep.subr.mxu0 0.0
        %1673 = vmatpush1.msra.mxu0 0.0
        %1674 = vmatprep.subr.mxu0 0.0
        %1675 = vmatpush1.msra.mxu0 0.0
        %1676 = vmatprep.subr.mxu0 0.0
        %1677 = vmatpush1.msra.mxu0 0.0
        %1678 = vmatprep.subr.mxu0 0.0
        %1679 = vmatpush1.msra.mxu0 0.0
        %1680 = vmatprep.subr.mxu0 0.0
        %1681 = vmatpush1.msra.mxu0 0.0
        %1682 = vmatprep.subr.mxu0 0.0
        %1683 = vmatpush1.msra.mxu0 0.0
        %1684 = vmatprep.subr.mxu0 0.0
        %1685 = vmatpush1.msra.mxu0 0.0
        %1686 = vmatprep.subr.mxu0 0.0
        %1687 = vmatpush1.msra.mxu0 0.0
        %1688 = vmatprep.subr.mxu0 0.0
        %1689 = vmatpush1.msra.mxu0 0.0
        %1690 = vmatprep.subr.mxu0 0.0
        %1691 = vmatpush1.msra.mxu0 0.0
        %1692 = vmatprep.subr.mxu0 0.0
        %1693 = vmatpush1.msra.mxu0 0.0
        %1694 = vmatprep.subr.mxu0 0.0
        %1695 = vmatpush1.msra.mxu0 0.0
        %1696 = vmatprep.subr.mxu0 0.0
        %1697 = vmatpush1.msra.mxu0 0.0
        %1698 = vmatprep.subr.mxu0 0.0
        %1699 = vmatpush1.msra.mxu0 0.0
        %1700 = vmatprep.subr.mxu0 0.0
        %1701 = vmatpush1.msra.mxu0 0.0
        %1702 = vmatprep.subr.mxu0 0.0
        %1703 = vmatpush1.msra.mxu0 0.0
        %1704 = vmatprep.subr.mxu0 0.0
        %1705 = vmatpush1.msra.mxu0 0.0
        %1706 = vmatprep.subr.mxu0 0.0
        %1707 = vmatpush1.msra.mxu0 0.0
        %1708 = vmatprep.subr.mxu0 0.0
        %1709 = vmatpush1.msra.mxu0 0.0
        %1710 = vmatprep.subr.mxu0 0.0
        %1711 = vmatpush1.msra.mxu0 0.0
        %1712 = vmatprep.subr.mxu0 0.0
        %1713 = vmatpush1.msra.mxu0 0.0
        %1714 = vmatprep.subr.mxu0 0.0
        %1715 = vmatpush1.msra.mxu0 0.0
        %1716 = vmatprep.subr.mxu0 0.0
        %1717 = vmatpush1.msra.mxu0 0.0
        %1718 = vmatprep.subr.mxu0 0.0
        %1719 = vmatpush1.msra.mxu0 0.0
        %1720 = vmatprep.subr.mxu0 0.0
        %1721 = vmatpush1.msra.mxu0 0.0
        %1722 = vmatprep.subr.mxu0 0.0
        %1723 = vmatpush1.msra.mxu0 0.0
        %1724 = vmatprep.subr.mxu0 0.0
        %1725 = vmatpush1.msra.mxu0 0.0
        %1726 = vmatprep.subr.mxu0 0.0
        %1727 = vmatpush1.msra.mxu0 0.0
        %1728 = vmatprep.subr.mxu0 0.0
        %1729 = vmatpush1.msra.mxu0 0.0
        %1730 = vmatprep.mubr.f32.mxu0 0.0
        %1731 = vmatmul.mubr.f32.gmra.mrb[0].mxu0 %v1664
        %v1732 = vpop.f32.mrb[0].mxu0
        %v1733 = vadd.f32 0.0, %v1732
        %v1734 = vpop.f32.mrb[0].mxu0
        %1735 = vdwg.mxu0
        %v1736 = vld [vmem:[%s5] sm:$0xff]
        %v1737 = vld [vmem:[%s5 + $0x8] sm:$0xff]
        %v1738 = vld [vmem:[%s5 + $0x10] sm:$0xff]
        %v1739 = vld [vmem:[%s5 + $0x18] sm:$0xff]
        %v1740 = vld [vmem:[%s5 + $0x20] sm:$0xff]
        %v1741 = vld [vmem:[%s5 + $0x28] sm:$0xff]
        %v1742 = vld [vmem:[%s5 + $0x30] sm:$0xff]
        %v1743 = vld [vmem:[%s5 + $0x38] sm:$0xff]
        %v1744 = vld [vmem:[%s5 + $0x40] sm:$0xff]
        %v1745 = vld [vmem:[%s5 + $0x48] sm:$0xff]
        %v1746 = vld [vmem:[%s5 + $0x50] sm:$0xff]
        %v1747 = vld [vmem:[%s5 + $0x58] sm:$0xff]
        %v1748 = vld [vmem:[%s5 + $0x60] sm:$0xff]
        %v1749 = vld [vmem:[%s5 + $0x68] sm:$0xff]
        %v1750 = vld [vmem:[%s5 + $0x70] sm:$0xff]
        %v1751 = vld [vmem:[%s5 + $0x78] sm:$0xff]
        %v1752 = vld [vmem:[%s5 + $0x80] sm:$0xff]
        %v1753 = vld [vmem:[%s5 + $0x88] sm:$0xff]
        %v1754 = vld [vmem:[%s5 + $0x90] sm:$0xff]
        %v1755 = vld [vmem:[%s5 + $0x98] sm:$0xff]
        %v1756 = vld [vmem:[%s5 + $0xa0] sm:$0xff]
        %v1757 = vld [vmem:[%s5 + $0xa8] sm:$0xff]
        %v1758 = vld [vmem:[%s5 + $0xb0] sm:$0xff]
        %v1759 = vld [vmem:[%s5 + $0xb8] sm:$0xff]
        %v1760 = vld [vmem:[%s5 + $0xc0] sm:$0xff]
        %v1761 = vld [vmem:[%s5 + $0xc8] sm:$0xff]
        %v1762 = vld [vmem:[%s5 + $0xd0] sm:$0xff]
        %v1763 = vld [vmem:[%s5 + $0xd8] sm:$0xff]
        %v1764 = vld [vmem:[%s5 + $0xe0] sm:$0xff]
        %v1765 = vld [vmem:[%s5 + $0xe8] sm:$0xff]
        %v1766 = vld [vmem:[%s5 + $0xf0] sm:$0xff]
        %v1767 = vld [vmem:[%s5 + $0xf8] sm:$0xff]
        %v1768 = vld [vmem:[%s5 + $0x100] sm:$0xff]
        %v1769 = vld [vmem:[%s5 + $0x108] sm:$0xff]
        %v1770 = vld [vmem:[%s5 + $0x110] sm:$0xff]
        %v1771 = vld [vmem:[%s5 + $0x118] sm:$0xff]
        %v1772 = vld [vmem:[%s5 + $0x120] sm:$0xff]
        %v1773 = vld [vmem:[%s5 + $0x128] sm:$0xff]
        %v1774 = vld [vmem:[%s5 + $0x130] sm:$0xff]
        %v1775 = vld [vmem:[%s5 + $0x138] sm:$0xff]
        %v1776 = vld [vmem:[%s5 + $0x140] sm:$0xff]
        %v1777 = vld [vmem:[%s5 + $0x148] sm:$0xff]
        %v1778 = vld [vmem:[%s5 + $0x150] sm:$0xff]
        %v1779 = vld [vmem:[%s5 + $0x158] sm:$0xff]
        %v1780 = vld [vmem:[%s5 + $0x160] sm:$0xff]
        %v1781 = vld [vmem:[%s5 + $0x168] sm:$0xff]
        %v1782 = vld [vmem:[%s5 + $0x170] sm:$0xff]
        %v1783 = vld [vmem:[%s5 + $0x178] sm:$0xff]
        %v1784 = vld [vmem:[%s9 + $0x4] ss:$0 sm:$0xff]
        %1785 = vmatprep.subr.mxu0 0.0
        %1786 = vmatpush1.msra.mxu0 %v1736
        %1787 = vmatprep.subr.mxu0 0.0
        %1788 = vmatpush1.msra.mxu0 %v1737
        %1789 = vmatprep.subr.mxu0 0.0
        %1790 = vmatpush1.msra.mxu0 %v1738
        %1791 = vmatprep.subr.mxu0 0.0
        %1792 = vmatpush1.msra.mxu0 %v1739
        %1793 = vmatprep.subr.mxu0 0.0
        %1794 = vmatpush1.msra.mxu0 %v1740
        %1795 = vmatprep.subr.mxu0 0.0
        %1796 = vmatpush1.msra.mxu0 %v1741
        %1797 = vmatprep.subr.mxu0 0.0
        %1798 = vmatpush1.msra.mxu0 %v1742
        %1799 = vmatprep.subr.mxu0 0.0
        %1800 = vmatpush1.msra.mxu0 %v1743
        %1801 = vmatprep.subr.mxu0 0.0
        %1802 = vmatpush1.msra.mxu0 %v1744
        %1803 = vmatprep.subr.mxu0 0.0
        %1804 = vmatpush1.msra.mxu0 %v1745
        %1805 = vmatprep.subr.mxu0 0.0
        %1806 = vmatpush1.msra.mxu0 %v1746
        %1807 = vmatprep.subr.mxu0 0.0
        %1808 = vmatpush1.msra.mxu0 %v1747
        %1809 = vmatprep.subr.mxu0 0.0
        %1810 = vmatpush1.msra.mxu0 %v1748
        %1811 = vmatprep.subr.mxu0 0.0
        %1812 = vmatpush1.msra.mxu0 %v1749
        %1813 = vmatprep.subr.mxu0 0.0
        %1814 = vmatpush1.msra.mxu0 %v1750
        %1815 = vmatprep.subr.mxu0 0.0
        %1816 = vmatpush1.msra.mxu0 %v1751
        %1817 = vmatprep.subr.mxu0 0.0
        %1818 = vmatpush1.msra.mxu0 %v1752
        %1819 = vmatprep.subr.mxu0 0.0
        %1820 = vmatpush1.msra.mxu0 %v1753
        %1821 = vmatprep.subr.mxu0 0.0
        %1822 = vmatpush1.msra.mxu0 %v1754
        %1823 = vmatprep.subr.mxu0 0.0
        %1824 = vmatpush1.msra.mxu0 %v1755
        %1825 = vmatprep.subr.mxu0 0.0
        %1826 = vmatpush1.msra.mxu0 %v1756
        %1827 = vmatprep.subr.mxu0 0.0
        %1828 = vmatpush1.msra.mxu0 %v1757
        %1829 = vmatprep.subr.mxu0 0.0
        %1830 = vmatpush1.msra.mxu0 %v1758
        %1831 = vmatprep.subr.mxu0 0.0
        %1832 = vmatpush1.msra.mxu0 %v1759
        %1833 = vmatprep.subr.mxu0 0.0
        %1834 = vmatpush1.msra.mxu0 %v1760
        %1835 = vmatprep.subr.mxu0 0.0
        %1836 = vmatpush1.msra.mxu0 %v1761
        %1837 = vmatprep.subr.mxu0 0.0
        %1838 = vmatpush1.msra.mxu0 %v1762
        %1839 = vmatprep.subr.mxu0 0.0
        %1840 = vmatpush1.msra.mxu0 %v1763
        %1841 = vmatprep.subr.mxu0 0.0
        %1842 = vmatpush1.msra.mxu0 %v1764
        %1843 = vmatprep.subr.mxu0 0.0
        %1844 = vmatpush1.msra.mxu0 %v1765
        %1845 = vmatprep.subr.mxu0 0.0
        %1846 = vmatpush1.msra.mxu0 %v1766
        %1847 = vmatprep.subr.mxu0 0.0
        %1848 = vmatpush1.msra.mxu0 %v1767
        %1849 = vmatprep.mubr.f32.mxu0 %v1658
        %1850 = vmatmul.mubr.f32.gmra.mrb[0].mxu0 %v1583
        %v1851 = vpop.f32.mrb[0].mxu0
        %v1852 = vadd.f32 %v1784, %v1851
        %v1853 = vpop.f32.mrb[0].mxu0
        %1854 = vdwg.mxu0
        %1855 = vmatprep.subr.mxu0 0.0
        %1856 = vmatpush1.msra.mxu0 %v1768
        %1857 = vmatprep.subr.mxu0 0.0
        %1858 = vmatpush1.msra.mxu0 %v1769
        %1859 = vmatprep.subr.mxu0 0.0
        %1860 = vmatpush1.msra.mxu0 %v1770
        %1861 = vmatprep.subr.mxu0 0.0
        %1862 = vmatpush1.msra.mxu0 %v1771
        %1863 = vmatprep.subr.mxu0 0.0
        %1864 = vmatpush1.msra.mxu0 %v1772
        %1865 = vmatprep.subr.mxu0 0.0
        %1866 = vmatpush1.msra.mxu0 %v1773
        %1867 = vmatprep.subr.mxu0 0.0
        %1868 = vmatpush1.msra.mxu0 %v1774
        %1869 = vmatprep.subr.mxu0 0.0
        %1870 = vmatpush1.msra.mxu0 %v1775
        %1871 = vmatprep.subr.mxu0 0.0
        %1872 = vmatpush1.msra.mxu0 %v1776
        %1873 = vmatprep.subr.mxu0 0.0
        %1874 = vmatpush1.msra.mxu0 %v1777
        %1875 = vmatprep.subr.mxu0 0.0
        %1876 = vmatpush1.msra.mxu0 %v1778
        %1877 = vmatprep.subr.mxu0 0.0
        %1878 = vmatpush1.msra.mxu0 %v1779
        %1879 = vmatprep.subr.mxu0 0.0
        %1880 = vmatpush1.msra.mxu0 %v1780
        %1881 = vmatprep.subr.mxu0 0.0
        %1882 = vmatpush1.msra.mxu0 %v1781
        %1883 = vmatprep.subr.mxu0 0.0
        %1884 = vmatpush1.msra.mxu0 %v1782
        %1885 = vmatprep.subr.mxu0 0.0
        %1886 = vmatpush1.msra.mxu0 %v1783
        %1887 = vmatprep.subr.mxu0 0.0
        %1888 = vmatpush1.msra.mxu0 0.0
        %1889 = vmatprep.subr.mxu0 0.0
        %1890 = vmatpush1.msra.mxu0 0.0
        %1891 = vmatprep.subr.mxu0 0.0
        %1892 = vmatpush1.msra.mxu0 0.0
        %1893 = vmatprep.subr.mxu0 0.0
        %1894 = vmatpush1.msra.mxu0 0.0
        %1895 = vmatprep.subr.mxu0 0.0
        %1896 = vmatpush1.msra.mxu0 0.0
        %1897 = vmatprep.subr.mxu0 0.0
        %1898 = vmatpush1.msra.mxu0 0.0
        %1899 = vmatprep.subr.mxu0 0.0
        %1900 = vmatpush1.msra.mxu0 0.0
        %1901 = vmatprep.subr.mxu0 0.0
        %1902 = vmatpush1.msra.mxu0 0.0
        %1903 = vmatprep.subr.mxu0 0.0
        %1904 = vmatpush1.msra.mxu0 0.0
        %1905 = vmatprep.subr.mxu0 0.0
        %1906 = vmatpush1.msra.mxu0 0.0
        %1907 = vmatprep.subr.mxu0 0.0
        %1908 = vmatpush1.msra.mxu0 0.0
        %1909 = vmatprep.subr.mxu0 0.0
        %1910 = vmatpush1.msra.mxu0 0.0
        %1911 = vmatprep.subr.mxu0 0.0
        %1912 = vmatpush1.msra.mxu0 0.0
        %1913 = vmatprep.subr.mxu0 0.0
        %1914 = vmatpush1.msra.mxu0 0.0
        %1915 = vmatprep.subr.mxu0 0.0
        %1916 = vmatpush1.msra.mxu0 0.0
        %1917 = vmatprep.subr.mxu0 0.0
        %1918 = vmatpush1.msra.mxu0 0.0
        %1919 = vmatprep.mubr.f32.mxu0 0.0
        %1920 = vmatmul.mubr.f32.gmra.mrb[0].mxu0 %v1733
        %v1921 = vpop.f32.mrb[0].mxu0
        %v1922 = vadd.f32 %v1852, %v1921
        %v1923 = vpop.f32.mrb[0].mxu0
        %1924 = vdwg.mxu0
        %v1925 = vmax.f32 %v1922, 0.0
        %vm1926 = vcmask 519168
        %1927 = vst.msk [vmem:[#allocation2 + $0x1] sm:$0xf] %vm1926, %v1925
        %vm1928 = vcmask 516096
        %1929 = vst.msk [vmem:[#allocation2 + $0x5] sm:$0x1] %vm1928, 0.0
        %v1930 = vld [vmem:[#allocation2] sm:$0xf]
        %v1931 = vld [vmem:[#allocation2 + $0x1] sm:$0xf]
        %v1932 = vld [vmem:[#allocation2 + $0x2] sm:$0xf]
        %1934 = vrot.lane.b32.xlu0 %v1931, 64
        %v1935 = vpop.permute.xlu0 %1934
        %vm1937 = vcmask 523264
        %v1938 = vsel %vm1937, %v1930, %v1935
        %v1939 = vld [vmem:[%s6] sm:$0xff]
        %v1940 = vld [vmem:[%s6 + $0x8] sm:$0xff]
        %v1941 = vld [vmem:[%s6 + $0x10] sm:$0xff]
        %v1942 = vld [vmem:[%s6 + $0x18] sm:$0xff]
        %v1943 = vld [vmem:[%s6 + $0x20] sm:$0xff]
        %v1944 = vld [vmem:[%s6 + $0x28] sm:$0xff]
        %v1945 = vld [vmem:[%s6 + $0x30] sm:$0xff]
        %v1946 = vld [vmem:[%s6 + $0x38] sm:$0xff]
        %v1947 = vld [vmem:[%s6 + $0x40] sm:$0xff]
        %v1948 = vld [vmem:[%s6 + $0x48] sm:$0xff]
        %v1949 = vld [vmem:[%s6 + $0x50] sm:$0xff]
        %v1950 = vld [vmem:[%s6 + $0x58] sm:$0xff]
        %v1951 = vld [vmem:[%s6 + $0x60] sm:$0xff]
        %v1952 = vld [vmem:[%s6 + $0x68] sm:$0xff]
        %v1953 = vld [vmem:[%s6 + $0x70] sm:$0xff]
        %v1954 = vld [vmem:[%s6 + $0x78] sm:$0xff]
        %v1955 = vld [vmem:[%s6 + $0x80] sm:$0xff]
        %v1956 = vld [vmem:[%s6 + $0x88] sm:$0xff]
        %v1957 = vld [vmem:[%s6 + $0x90] sm:$0xff]
        %v1958 = vld [vmem:[%s6 + $0x98] sm:$0xff]
        %v1959 = vld [vmem:[%s6 + $0xa0] sm:$0xff]
        %v1960 = vld [vmem:[%s6 + $0xa8] sm:$0xff]
        %v1961 = vld [vmem:[%s6 + $0xb0] sm:$0xff]
        %v1962 = vld [vmem:[%s6 + $0xb8] sm:$0xff]
        %v1963 = vld [vmem:[%s9 + $0x5] ss:$0 sm:$0xff]
        %v1965 = vsel %vm1937, %v1932, 0
        %1967 = vmatprep.subr.mxu0 0.0
        %1968 = vmatpush1.msra.mxu0 %v1939
        %1969 = vmatprep.subr.mxu0 0.0
        %1970 = vmatpush1.msra.mxu0 %v1940
        %1971 = vmatprep.subr.mxu0 0.0
        %1972 = vmatpush1.msra.mxu0 %v1941
        %1973 = vmatprep.subr.mxu0 0.0
        %1974 = vmatpush1.msra.mxu0 %v1942
        %1975 = vmatprep.subr.mxu0 0.0
        %1976 = vmatpush1.msra.mxu0 %v1943
        %1977 = vmatprep.subr.mxu0 0.0
        %1978 = vmatpush1.msra.mxu0 %v1944
        %1979 = vmatprep.subr.mxu0 0.0
        %1980 = vmatpush1.msra.mxu0 %v1945
        %1981 = vmatprep.subr.mxu0 0.0
        %1982 = vmatpush1.msra.mxu0 %v1946
        %1983 = vmatprep.subr.mxu0 0.0
        %1984 = vmatpush1.msra.mxu0 %v1947
        %1985 = vmatprep.subr.mxu0 0.0
        %1986 = vmatpush1.msra.mxu0 %v1948
        %1987 = vmatprep.subr.mxu0 0.0
        %1988 = vmatpush1.msra.mxu0 %v1949
        %1989 = vmatprep.subr.mxu0 0.0
        %1990 = vmatpush1.msra.mxu0 %v1950
        %1991 = vmatprep.subr.mxu0 0.0
        %1992 = vmatpush1.msra.mxu0 %v1951
        %1993 = vmatprep.subr.mxu0 0.0
        %1994 = vmatpush1.msra.mxu0 %v1952
        %1995 = vmatprep.subr.mxu0 0.0
        %1996 = vmatpush1.msra.mxu0 %v1953
        %1997 = vmatprep.subr.mxu0 0.0
        %1998 = vmatpush1.msra.mxu0 %v1954
        %1999 = vmatprep.subr.mxu0 0.0
        %2000 = vmatpush1.msra.mxu0 %v1955
        %2001 = vmatprep.subr.mxu0 0.0
        %2002 = vmatpush1.msra.mxu0 %v1956
        %2003 = vmatprep.subr.mxu0 0.0
        %2004 = vmatpush1.msra.mxu0 %v1957
        %2005 = vmatprep.subr.mxu0 0.0
        %2006 = vmatpush1.msra.mxu0 %v1958
        %2007 = vmatprep.subr.mxu0 0.0
        %2008 = vmatpush1.msra.mxu0 %v1959
        %2009 = vmatprep.subr.mxu0 0.0
        %2010 = vmatpush1.msra.mxu0 %v1960
        %2011 = vmatprep.subr.mxu0 0.0
        %2012 = vmatpush1.msra.mxu0 %v1961
        %2013 = vmatprep.subr.mxu0 0.0
        %2014 = vmatpush1.msra.mxu0 %v1962
        %2015 = vmatprep.subr.mxu0 0.0
        %2016 = vmatpush1.msra.mxu0 0.0
        %2017 = vmatprep.subr.mxu0 0.0
        %2018 = vmatpush1.msra.mxu0 0.0
        %2019 = vmatprep.subr.mxu0 0.0
        %2020 = vmatpush1.msra.mxu0 0.0
        %2021 = vmatprep.subr.mxu0 0.0
        %2022 = vmatpush1.msra.mxu0 0.0
        %2023 = vmatprep.subr.mxu0 0.0
        %2024 = vmatpush1.msra.mxu0 0.0
        %2025 = vmatprep.subr.mxu0 0.0
        %2026 = vmatpush1.msra.mxu0 0.0
        %2027 = vmatprep.subr.mxu0 0.0
        %2028 = vmatpush1.msra.mxu0 0.0
        %2029 = vmatprep.subr.mxu0 0.0
        %2030 = vmatpush1.msra.mxu0 0.0
        %2031 = vmatprep.mubr.f32.mxu0 %v1965
        %2032 = vmatmul.mubr.f32.gmra.mrb[0].mxu0 %v1938
        %v2033 = vpop.f32.mrb[0].mxu0
        %v2034 = vadd.f32 %v1963, %v2033
        %v2035 = vpop.f32.mrb[0].mxu0
        %2036 = vdwg.mxu0
        %2037 = vst [vmem:[%s507] sm:$0xf] %v2034
        %s2038 = sand.u32 %s258, 1
        %s2039 = scalar_lea.sflag [#allocation5], %s2038
        %s2040 = sand.u32 %s258, 1
        %s2041 = smul.addr %s2040, 8
        %s2042 = scalar_lea.vmem [#allocation12], %s2041
        %s2043 = sand.u32 %s35, 1
        %s2044 = scalar_lea.sflag [#allocation14], %s2043
        %s2045 = sand.u32 %s284, 1
        %s2046 = smul.addr %s2045, 8
        %s2047 = scalar_lea.vmem [#allocation13], %s2046
        %s2048 = sand.u32 %s35, 1
        %s2049 = scalar_lea.sflag [#allocation14], %s2048
        %s2050 = sand.u32 %s310, 1
        %s2051 = smul.addr %s2050, 4
        %s2052 = scalar_lea.vmem [#allocation15], %s2051
        // Predicated region
        $region81: #{tpu_custom_call.1} parent=59 // pred_check
          %p2053 = pneg %p268
        $region82: #{tpu_custom_call.1} parent=59 // pred_check_branch
          %2055 = sbr.rel (%p2053) target = $region84
        $region83: #{tpu_custom_call.1} parent=59 // pred_region
          %s2057 = ssub.s32 128, 128
          %2058 = vsyncadd %s2039, %s2057
          %s2059 = smul.addr %s35, 128
          %s2060 = scalar_lea.hbm %s10, %s2059
          %s2062 = sshll.u32 %s2042, 4
          %s2063 = int_to_ptr.vmem [resolvable:$true] %s2062
          %2065 = dma.vmem_to_hbm [thread:$0]  %s2063, 128, %s2060, %s2039
        $region84: #{tpu_custom_call.1} parent=59 // pred_fallthru
          _
        // Predicated region
        $region85: #{tpu_custom_call.1} parent=59 // pred_check
          %p2066 = pneg %p294
        $region86: #{tpu_custom_call.1} parent=59 // pred_check_branch
          %2068 = sbr.rel (%p2066) target = $region88
        $region87: #{tpu_custom_call.1} parent=59 // pred_region
          %s2070 = ssub.s32 128, 128
          %2071 = vsyncadd %s2044, %s2070
          %s2072 = smul.addr %s35, 128
          %s2073 = scalar_lea.hbm %s11, %s2072
          %s2075 = sshll.u32 %s2047, 4
          %s2076 = int_to_ptr.vmem [resolvable:$true] %s2075
          %2078 = dma.vmem_to_hbm [thread:$0]  %s2076, 128, %s2073, %s2044
        $region88: #{tpu_custom_call.1} parent=59 // pred_fallthru
          _
        // Predicated region
        $region89: #{tpu_custom_call.1} parent=59 // pred_check
          %p2079 = pneg %p320
        $region90: #{tpu_custom_call.1} parent=59 // pred_check_branch
          %2081 = sbr.rel (%p2079) target = $region92
        $region91: #{tpu_custom_call.1} parent=59 // pred_region
          %s2083 = ssub.s32 64, 64
          %2084 = vsyncadd %s2049, %s2083
          %s2085 = smul.addr %s35, 64
          %s2086 = scalar_lea.hbm %s12, %s2085
          %s2088 = sshll.u32 %s2052, 4
          %s2089 = int_to_ptr.vmem [resolvable:$true] %s2088
          %2091 = dma.vmem_to_hbm [thread:$0]  %s2089, 64, %s2086, %s2049
        $region92: #{tpu_custom_call.1} parent=59 // pred_fallthru
          _
      $region60: #{tpu_custom_call.1} parent=5 // pred_fallthru
        _
      %p2092 = scmp.le.s32.totalorder 2, %s30
      // Predicated region
      $region93: #{tpu_custom_call.1} parent=5 // pred_check
        %p2093 = pneg %p2092
      $region94: #{tpu_custom_call.1} parent=5 // pred_check_branch
        %2095 = sbr.rel (%p2093) target = $region96
      $region95: #{tpu_custom_call.1} parent=5 // pred_region
        %s2096 = ssub.s32 %s30, 2
        // Predicated region
        $region97: #{tpu_custom_call.1} parent=95 // pred_check
          %p2097 = pneg %p274
        $region98: #{tpu_custom_call.1} parent=95 // pred_check_branch
          %2099 = sbr.rel (%p2097) target = $region100
        $region99: #{tpu_custom_call.1} parent=95 // pred_region
          %s2100 = sand.u32 %s259, 1
          %s2101 = scalar_lea.sflag [#allocation5], %s2100
          %s2102 = sand.u32 %s259, 1
          %s2103 = smul.addr %s2102, 8
          %s2104 = scalar_lea.vmem [#allocation12], %s2103
          %2105 = dma.done %s2101, 128
        $region100: #{tpu_custom_call.1} parent=95 // pred_fallthru
          _
        // Predicated region
        $region101: #{tpu_custom_call.1} parent=95 // pred_check
          %p2106 = pneg %p300
        $region102: #{tpu_custom_call.1} parent=95 // pred_check_branch
          %2108 = sbr.rel (%p2106) target = $region104
        $region103: #{tpu_custom_call.1} parent=95 // pred_region
          %s2109 = sand.u32 %s36, 1
          %s2110 = scalar_lea.sflag [#allocation14], %s2109
          %s2111 = sand.u32 %s285, 1
          %s2112 = smul.addr %s2111, 8
          %s2113 = scalar_lea.vmem [#allocation13], %s2112
          %2114 = dma.done %s2110, 128
        $region104: #{tpu_custom_call.1} parent=95 // pred_fallthru
          _
        // Predicated region
        $region105: #{tpu_custom_call.1} parent=95 // pred_check
          %p2115 = pneg %p326
        $region106: #{tpu_custom_call.1} parent=95 // pred_check_branch
          %2117 = sbr.rel (%p2115) target = $region108
        $region107: #{tpu_custom_call.1} parent=95 // pred_region
          %s2118 = sand.u32 %s36, 1
          %s2119 = scalar_lea.sflag [#allocation14], %s2118
          %s2120 = sand.u32 %s311, 1
          %s2121 = smul.addr %s2120, 4
          %s2122 = scalar_lea.vmem [#allocation15], %s2121
          %2123 = dma.done %s2119, 64
        $region108: #{tpu_custom_call.1} parent=95 // pred_fallthru
          _
      $region96: #{tpu_custom_call.1} parent=5 // pred_fallthru
        _
    $region6: #{tpu_custom_call.1} parent=1 // loop_footer
      %s34 = sadd.s32 1, %s30
    $region7: #{tpu_custom_call.1} parent=1 // loop_footer_branch
      %29 = sbr.rel target = $region3
    $region8: #{tpu_custom_call.1} parent=1 // loop_exit
      _
    %2124 = vsyncpa [#allocation4], 1
    %s2125 = scalar_lea.sflag [#allocation4], 1
    %2126 = vsyncpa %s2125, 1
    %2127 = vsyncpa [#allocation7], 1
    %2128 = vsyncpa [#allocation10], 1
    %2129 = vsyncpa [#allocation5], 1
    %s2130 = scalar_lea.sflag [#allocation5], 1
    %2131 = vsyncpa %s2130, 1
    %2132 = vsyncpa [#allocation14], 1
    %s2133 = scalar_lea.sflag [#allocation14], 1
    %2134 = vsyncpa %s2133, 1

</llo_original>
